<compile_context>
chip_gen: v6e
topology: v6e:2x2x1
jax: 0.10.0
libtpu: 0.0.40
codegen_flags: <defaults>
</compile_context>

<pallas_src>
import functools

import jax
import jax.numpy as jnp
from jax import lax
from jax.experimental import pallas as pl
from jax.experimental.pallas import tpu as pltpu


def _model_kernel(x_ref,
                  w1a_ref, b1a_ref, w2a_ref, b2a_ref,
                  w1b_ref, b1b_ref, w2b_ref, b2b_ref,
                  w1c_ref, b1c_ref, w2c_ref, b2c_ref,
                  o_ref, *, N, H, W):
    """Fused 3x CustomLayer forward on a lane-dense (N, H*W) plane.

    x_ref   : (N, H*W)   f32 VMEM
    w1*/b1* : (27,)/(3,) f32 SMEM  conv1 weights (flat OIHW) / bias
    w2*/b2* : (12,)/(1,) f32 SMEM  conv2 weights (flat OIHW) / bias
    o_ref   : (N, H*W)   f32 VMEM
    """
    HW = H * W

    # ---- boundary-validity masks, generated in-kernel (no mask DMA) --------
    flat = lax.broadcasted_iota(jnp.int32, (N, HW), 1)       # 0..HW-1 per row
    if W & (W - 1) == 0:                                      # W power of two
        col = flat & (W - 1)                                  # -> bitwise AND
    else:
        col = flat - (flat // W) * W
    row_has_up    = flat >= W                  # row - 1 >= 0      (dh = -1)
    row_has_down  = flat < (H - 1) * W         # row + 1 <= H - 1  (dh = +1)
    col_has_left  = col >= 1                   # col - 1 >= 0      (dw = -1)
    col_has_right = col <= W - 2               # col + 1 <= W - 1  (dw = +1)

    mask_cache = {}

    def valid_mask(dh, dw):
        """Boolean plane: tap (dh, dw) reads inside the image (memoized)."""
        key = (dh, dw)
        if key not in mask_cache:
            parts = []
            if dh == -1:
                parts.append(row_has_up)
            elif dh == 1:
                parts.append(row_has_down)
            if dw == -1:
                parts.append(col_has_left)
            elif dw == 1:
                parts.append(col_has_right)
            m = parts[0]
            for p in parts[1:]:
                m = m & p
            mask_cache[key] = m
        return mask_cache[key]

    def tap(plane, dh, dw):
        """`plane` shifted by (dh, dw) spatially, zero-filled outside the image."""
        s = dh * W + dw
        if s == 0:
            return plane
        rolled = pltpu.roll(plane, (-s) % HW, axis=1)         # XLU lane rotation
        return jnp.where(valid_mask(dh, dw), rolled, 0.0)

    def layer(xin, w1, b1, w2, b2):
        # conv1: Conv2d(1 -> 3, k=3, padding='same')  [symmetric pad (1,1)].
        # Stream per offset: one masked roll, immediately accumulated into the
        # three channel accumulators; bias folded into the first term.
        mids = [None, None, None]
        for kh in range(3):
            for kw in range(3):
                t = tap(xin, kh - 1, kw - 1)
                for co in range(3):
                    term = w1[(co * 3 + kh) * 3 + kw] * t
                    if mids[co] is None:
                        mids[co] = term + b1[co]
                    else:
                        mids[co] = mids[co] + term
        # conv2: Conv2d(3 -> 1, k=2, padding='same')  [even k: pad 0 before, 1 after].
        # Channel reduction hoisted ABOVE the roll: 3 rolls instead of 9.
        out = None
        for kh in range(2):
            for kw in range(2):
                g = (w2[(0 * 2 + kh) * 2 + kw] * mids[0]
                     + w2[(1 * 2 + kh) * 2 + kw] * mids[1]
                     + w2[(2 * 2 + kh) * 2 + kw] * mids[2])
                t = tap(g, kh, kw)
                if out is None:
                    out = t + b2[0]            # (0,0) offset: no roll; fold bias
                else:
                    out = out + t
        return out

    # TODO(synk): the original forward calls self.aa(input), which is undefined
    # in the module; interpreted as self.layer1 per __init__.
    h = layer(x_ref[...], w1a_ref, b1a_ref, w2a_ref, b2a_ref)   # layer1
    h = layer(h, w1b_ref, b1b_ref, w2b_ref, b2b_ref)            # layerm
    h = layer(h, w1c_ref, b1c_ref, w2c_ref, b2c_ref)            # layern
    o_ref[...] = h


def custom_model_fused(x, p1, pm, pn):
    """x: (N, 1, H, W) f32; p*: (w1 (3,1,3,3), b1 (3,), w2 (1,3,2,2), b2 (1,))."""
    N, C, H, W = x.shape
    assert C == 1, "CustomModel's first layer expects a single input channel"
    HW = H * W
    # Gridless, whole-plane-in-VMEM design; plenty for toy sizes.
    # TODO(synk): add (8,128) spatial tiling with halo-aware index_maps before
    # N*H*W*4 B approaches the scoped VMEM limit (32 MiB on v6e/v7x, 64 MiB phys on v7x).
    assert N * HW * 4 < (16 << 20), "plane too large for the gridless fused kernel"

    def flat(p):
        w1, b1, w2, b2 = p
        return (w1.reshape(-1).astype(jnp.float32), b1.astype(jnp.float32),
                w2.reshape(-1).astype(jnp.float32), b2.astype(jnp.float32))

    vmem = pl.BlockSpec(memory_space=pltpu.MemorySpace.VMEM)
    smem = pl.BlockSpec(memory_space=pltpu.MemorySpace.SMEM)
    out_flat = pl.pallas_call(
        functools.partial(_model_kernel, N=N, H=H, W=W),
        out_shape=jax.ShapeDtypeStruct((N, HW), jnp.float32),
        in_specs=[vmem] + [smem] * 12,
        out_specs=vmem,
    )(x.reshape(N, HW), *flat(p1), *flat(pm), *flat(pn))
    return out_flat.reshape(N, 1, H, W)


custom_model = jax.jit(custom_model_fused)


def _init_conv_params(key, cout, cin, k):
    """Deterministic init matching PyTorch Conv2d defaults (U(-1/sqrt(fan_in), +))."""
    kw_, kb_ = jax.random.split(key)
    fan_in = cin * k * k
    bound = 1.0 / float(fan_in) ** 0.5
    w = jax.random.uniform(kw_, (cout, cin, k, k), jnp.float32, -bound, bound)
    b = jax.random.uniform(kb_, (cout,), jnp.float32, -bound, bound)
    return w, b


def _init_layer_params(key):
    k1, k2 = jax.random.split(key)
    w1, b1 = _init_conv_params(k1, 3, 1, 3)   # Conv2d(1, 3, k=3, padding='same')
    w2, b2 = _init_conv_params(k2, 1, 3, 2)   # Conv2d(3, 1, k=2, padding='same')
    return (w1, b1, w2, b2)


def _model_ref(x, *params):
    """Pure-XLA reference (cross-correlation, PyTorch 'same' padding conventions)."""
    dn = ("NCHW", "OIHW", "NCHW")
    for (w1, b1, w2, b2) in params:
        x = lax.conv_general_dilated(x, w1, (1, 1), ((1, 1), (1, 1)),
                                     dimension_numbers=dn)
        x = x + b1.reshape(1, -1, 1, 1)
        x = lax.conv_general_dilated(x, w2, (1, 1), ((0, 1), (0, 1)),
                                     dimension_numbers=dn)
        x = x + b2.reshape(1, -1, 1, 1)
    return x


if __name__ == "__main__":
    key = jax.random.PRNGKey(0)
    k_x, k1, km, kn = jax.random.split(key, 4)

    # Input: batch=2, 1 channel (layer1 expects 1 input channel), 16x16 spatial.
    x = jax.random.normal(k_x, (2, 1, 16, 16), dtype=jnp.float32)
    p1 = _init_layer_params(k1)
    pm = _init_layer_params(km)
    pn = _init_layer_params(kn)

    out = custom_model(x, p1, pm, pn)
    out = jax.block_until_ready(out)
    assert out.shape == (2, 1, 16, 16), out.shape
    assert out.dtype == jnp.float32

    # Numerical check against plain-XLA convolutions with PyTorch 'same' padding.
    ref = _model_ref(x, p1, pm, pn)
    err = float(jnp.max(jnp.abs(out - ref)))
    assert err < 1e-4, f"max abs error vs conv reference: {err}"

    print("KERNEL_OK")
</pallas_src>

<mosaic_0001>
module attributes {stable_mosaic.version = 11 : i64} {
  func.func @_model_kernel(%arg0: memref<2x256xf32, #tpu.memory_space<vmem>>, %arg1: memref<27xf32, #tpu.memory_space<smem>>, %arg2: memref<3xf32, #tpu.memory_space<smem>>, %arg3: memref<12xf32, #tpu.memory_space<smem>>, %arg4: memref<1xf32, #tpu.memory_space<smem>>, %arg5: memref<27xf32, #tpu.memory_space<smem>>, %arg6: memref<3xf32, #tpu.memory_space<smem>>, %arg7: memref<12xf32, #tpu.memory_space<smem>>, %arg8: memref<1xf32, #tpu.memory_space<smem>>, %arg9: memref<27xf32, #tpu.memory_space<smem>>, %arg10: memref<3xf32, #tpu.memory_space<smem>>, %arg11: memref<12xf32, #tpu.memory_space<smem>>, %arg12: memref<1xf32, #tpu.memory_space<smem>>, %arg13: memref<2x256xf32, #tpu.memory_space<vmem>>) attributes {dimension_semantics = [], scalar_prefetch = 0 : i64, scratch_operands = 0 : i64, tpu.core_type = #tpu.core_type<tc>} {
    %0 = tpu.iota {dimensions = array<i32: 1>} : vector<2x256xi32>
    %c15_i32 = arith.constant 15 : i32
    %1 = vector.broadcast %c15_i32 : i32 to vector<2x256xi32>
    %2 = arith.andi %0, %1 : vector<2x256xi32>
    %c16_i32 = arith.constant 16 : i32
    %3 = vector.broadcast %c16_i32 : i32 to vector<2x256xi32>
    %4 = arith.cmpi sge, %0, %3 : vector<2x256xi32>
    %c240_i32 = arith.constant 240 : i32
    %5 = vector.broadcast %c240_i32 : i32 to vector<2x256xi32>
    %6 = arith.cmpi slt, %0, %5 : vector<2x256xi32>
    %c1_i32 = arith.constant 1 : i32
    %7 = vector.broadcast %c1_i32 : i32 to vector<2x256xi32>
    %8 = arith.cmpi sge, %2, %7 : vector<2x256xi32>
    %c14_i32 = arith.constant 14 : i32
    %9 = vector.broadcast %c14_i32 : i32 to vector<2x256xi32>
    %10 = arith.cmpi sle, %2, %9 : vector<2x256xi32>
    %c0 = arith.constant 0 : index
    %c0_0 = arith.constant 0 : index
    %11 = vector.load %arg0[%c0, %c0_0] : memref<2x256xf32, #tpu.memory_space<vmem>>, vector<2x256xf32>
    %c17_i32 = arith.constant 17 : i32
    %12 = tpu.dynamic_rotate %11 by %c17_i32 dim 1 : vector<2x256xf32>, i32 -> vector<2x256xf32>
    %13 = arith.andi %4, %8 : vector<2x256xi1>
    %cst = arith.constant 0.000000e+00 : f32
    %14 = vector.broadcast %cst : f32 to vector<2x256xf32>
    %15 = arith.select %13, %12, %14 : vector<2x256xi1>, vector<2x256xf32>
    %c0_1 = arith.constant 0 : index
    %16 = memref.load %arg1[%c0_1] : memref<27xf32, #tpu.memory_space<smem>>
    %17 = vector.broadcast %16 : f32 to vector<2x256xf32>
    %18 = arith.mulf %17, %15 : vector<2x256xf32>
    %c0_2 = arith.constant 0 : index
    %19 = memref.load %arg2[%c0_2] : memref<3xf32, #tpu.memory_space<smem>>
    %20 = vector.broadcast %19 : f32 to vector<2x256xf32>
    %21 = arith.addf %18, %20 : vector<2x256xf32>
    %c9 = arith.constant 9 : index
    %22 = memref.load %arg1[%c9] : memref<27xf32, #tpu.memory_space<smem>>
    %23 = vector.broadcast %22 : f32 to vector<2x256xf32>
    %24 = arith.mulf %23, %15 : vector<2x256xf32>
    %c1 = arith.constant 1 : index
    %25 = memref.load %arg2[%c1] : memref<3xf32, #tpu.memory_space<smem>>
    %26 = vector.broadcast %25 : f32 to vector<2x256xf32>
    %27 = arith.addf %24, %26 : vector<2x256xf32>
    %c18 = arith.constant 18 : index
    %28 = memref.load %arg1[%c18] : memref<27xf32, #tpu.memory_space<smem>>
    %29 = vector.broadcast %28 : f32 to vector<2x256xf32>
    %30 = arith.mulf %29, %15 : vector<2x256xf32>
    %c2 = arith.constant 2 : index
    %31 = memref.load %arg2[%c2] : memref<3xf32, #tpu.memory_space<smem>>
    %32 = vector.broadcast %31 : f32 to vector<2x256xf32>
    %33 = arith.addf %30, %32 : vector<2x256xf32>
    %c16_i32_3 = arith.constant 16 : i32
    %34 = tpu.dynamic_rotate %11 by %c16_i32_3 dim 1 : vector<2x256xf32>, i32 -> vector<2x256xf32>
    %cst_4 = arith.constant 0.000000e+00 : f32
    %35 = vector.broadcast %cst_4 : f32 to vector<2x256xf32>
    %36 = arith.select %4, %34, %35 : vector<2x256xi1>, vector<2x256xf32>
    %c1_5 = arith.constant 1 : index
    %37 = memref.load %arg1[%c1_5] : memref<27xf32, #tpu.memory_space<smem>>
    %38 = vector.broadcast %37 : f32 to vector<2x256xf32>
    %39 = arith.mulf %38, %36 : vector<2x256xf32>
    %40 = arith.addf %21, %39 : vector<2x256xf32>
    %c10 = arith.constant 10 : index
    %41 = memref.load %arg1[%c10] : memref<27xf32, #tpu.memory_space<smem>>
    %42 = vector.broadcast %41 : f32 to vector<2x256xf32>
    %43 = arith.mulf %42, %36 : vector<2x256xf32>
    %44 = arith.addf %27, %43 : vector<2x256xf32>
    %c19 = arith.constant 19 : index
    %45 = memref.load %arg1[%c19] : memref<27xf32, #tpu.memory_space<smem>>
    %46 = vector.broadcast %45 : f32 to vector<2x256xf32>
    %47 = arith.mulf %46, %36 : vector<2x256xf32>
    %48 = arith.addf %33, %47 : vector<2x256xf32>
    %c15_i32_6 = arith.constant 15 : i32
    %49 = tpu.dynamic_rotate %11 by %c15_i32_6 dim 1 : vector<2x256xf32>, i32 -> vector<2x256xf32>
    %50 = arith.andi %4, %10 : vector<2x256xi1>
    %cst_7 = arith.constant 0.000000e+00 : f32
    %51 = vector.broadcast %cst_7 : f32 to vector<2x256xf32>
    %52 = arith.select %50, %49, %51 : vector<2x256xi1>, vector<2x256xf32>
    %c2_8 = arith.constant 2 : index
    %53 = memref.load %arg1[%c2_8] : memref<27xf32, #tpu.memory_space<smem>>
    %54 = vector.broadcast %53 : f32 to vector<2x256xf32>
    %55 = arith.mulf %54, %52 : vector<2x256xf32>
    %56 = arith.addf %40, %55 : vector<2x256xf32>
    %c11 = arith.constant 11 : index
    %57 = memref.load %arg1[%c11] : memref<27xf32, #tpu.memory_space<smem>>
    %58 = vector.broadcast %57 : f32 to vector<2x256xf32>
    %59 = arith.mulf %58, %52 : vector<2x256xf32>
    %60 = arith.addf %44, %59 : vector<2x256xf32>
    %c20 = arith.constant 20 : index
    %61 = memref.load %arg1[%c20] : memref<27xf32, #tpu.memory_space<smem>>
    %62 = vector.broadcast %61 : f32 to vector<2x256xf32>
    %63 = arith.mulf %62, %52 : vector<2x256xf32>
    %64 = arith.addf %48, %63 : vector<2x256xf32>
    %c1_i32_9 = arith.constant 1 : i32
    %65 = tpu.dynamic_rotate %11 by %c1_i32_9 dim 1 : vector<2x256xf32>, i32 -> vector<2x256xf32>
    %cst_10 = arith.constant 0.000000e+00 : f32
    %66 = vector.broadcast %cst_10 : f32 to vector<2x256xf32>
    %67 = arith.select %8, %65, %66 : vector<2x256xi1>, vector<2x256xf32>
    %c3 = arith.constant 3 : index
    %68 = memref.load %arg1[%c3] : memref<27xf32, #tpu.memory_space<smem>>
    %69 = vector.broadcast %68 : f32 to vector<2x256xf32>
    %70 = arith.mulf %69, %67 : vector<2x256xf32>
    %71 = arith.addf %56, %70 : vector<2x256xf32>
    %c12 = arith.constant 12 : index
    %72 = memref.load %arg1[%c12] : memref<27xf32, #tpu.memory_space<smem>>
    %73 = vector.broadcast %72 : f32 to vector<2x256xf32>
    %74 = arith.mulf %73, %67 : vector<2x256xf32>
    %75 = arith.addf %60, %74 : vector<2x256xf32>
    %c21 = arith.constant 21 : index
    %76 = memref.load %arg1[%c21] : memref<27xf32, #tpu.memory_space<smem>>
    %77 = vector.broadcast %76 : f32 to vector<2x256xf32>
    %78 = arith.mulf %77, %67 : vector<2x256xf32>
    %79 = arith.addf %64, %78 : vector<2x256xf32>
    %c4 = arith.constant 4 : index
    %80 = memref.load %arg1[%c4] : memref<27xf32, #tpu.memory_space<smem>>
    %81 = vector.broadcast %80 : f32 to vector<2x256xf32>
    %82 = arith.mulf %81, %11 : vector<2x256xf32>
    %83 = arith.addf %71, %82 : vector<2x256xf32>
    %c13 = arith.constant 13 : index
    %84 = memref.load %arg1[%c13] : memref<27xf32, #tpu.memory_space<smem>>
    %85 = vector.broadcast %84 : f32 to vector<2x256xf32>
    %86 = arith.mulf %85, %11 : vector<2x256xf32>
    %87 = arith.addf %75, %86 : vector<2x256xf32>
    %c22 = arith.constant 22 : index
    %88 = memref.load %arg1[%c22] : memref<27xf32, #tpu.memory_space<smem>>
    %89 = vector.broadcast %88 : f32 to vector<2x256xf32>
    %90 = arith.mulf %89, %11 : vector<2x256xf32>
    %91 = arith.addf %79, %90 : vector<2x256xf32>
    %c255_i32 = arith.constant 255 : i32
    %92 = tpu.dynamic_rotate %11 by %c255_i32 dim 1 : vector<2x256xf32>, i32 -> vector<2x256xf32>
    %cst_11 = arith.constant 0.000000e+00 : f32
    %93 = vector.broadcast %cst_11 : f32 to vector<2x256xf32>
    %94 = arith.select %10, %92, %93 : vector<2x256xi1>, vector<2x256xf32>
    %c5 = arith.constant 5 : index
    %95 = memref.load %arg1[%c5] : memref<27xf32, #tpu.memory_space<smem>>
    %96 = vector.broadcast %95 : f32 to vector<2x256xf32>
    %97 = arith.mulf %96, %94 : vector<2x256xf32>
    %98 = arith.addf %83, %97 : vector<2x256xf32>
    %c14 = arith.constant 14 : index
    %99 = memref.load %arg1[%c14] : memref<27xf32, #tpu.memory_space<smem>>
    %100 = vector.broadcast %99 : f32 to vector<2x256xf32>
    %101 = arith.mulf %100, %94 : vector<2x256xf32>
    %102 = arith.addf %87, %101 : vector<2x256xf32>
    %c23 = arith.constant 23 : index
    %103 = memref.load %arg1[%c23] : memref<27xf32, #tpu.memory_space<smem>>
    %104 = vector.broadcast %103 : f32 to vector<2x256xf32>
    %105 = arith.mulf %104, %94 : vector<2x256xf32>
    %106 = arith.addf %91, %105 : vector<2x256xf32>
    %c241_i32 = arith.constant 241 : i32
    %107 = tpu.dynamic_rotate %11 by %c241_i32 dim 1 : vector<2x256xf32>, i32 -> vector<2x256xf32>
    %108 = arith.andi %6, %8 : vector<2x256xi1>
    %cst_12 = arith.constant 0.000000e+00 : f32
    %109 = vector.broadcast %cst_12 : f32 to vector<2x256xf32>
    %110 = arith.select %108, %107, %109 : vector<2x256xi1>, vector<2x256xf32>
    %c6 = arith.constant 6 : index
    %111 = memref.load %arg1[%c6] : memref<27xf32, #tpu.memory_space<smem>>
    %112 = vector.broadcast %111 : f32 to vector<2x256xf32>
    %113 = arith.mulf %112, %110 : vector<2x256xf32>
    %114 = arith.addf %98, %113 : vector<2x256xf32>
    %c15 = arith.constant 15 : index
    %115 = memref.load %arg1[%c15] : memref<27xf32, #tpu.memory_space<smem>>
    %116 = vector.broadcast %115 : f32 to vector<2x256xf32>
    %117 = arith.mulf %116, %110 : vector<2x256xf32>
    %118 = arith.addf %102, %117 : vector<2x256xf32>
    %c24 = arith.constant 24 : index
    %119 = memref.load %arg1[%c24] : memref<27xf32, #tpu.memory_space<smem>>
    %120 = vector.broadcast %119 : f32 to vector<2x256xf32>
    %121 = arith.mulf %120, %110 : vector<2x256xf32>
    %122 = arith.addf %106, %121 : vector<2x256xf32>
    %c240_i32_13 = arith.constant 240 : i32
    %123 = tpu.dynamic_rotate %11 by %c240_i32_13 dim 1 : vector<2x256xf32>, i32 -> vector<2x256xf32>
    %cst_14 = arith.constant 0.000000e+00 : f32
    %124 = vector.broadcast %cst_14 : f32 to vector<2x256xf32>
    %125 = arith.select %6, %123, %124 : vector<2x256xi1>, vector<2x256xf32>
    %c7 = arith.constant 7 : index
    %126 = memref.load %arg1[%c7] : memref<27xf32, #tpu.memory_space<smem>>
    %127 = vector.broadcast %126 : f32 to vector<2x256xf32>
    %128 = arith.mulf %127, %125 : vector<2x256xf32>
    %129 = arith.addf %114, %128 : vector<2x256xf32>
    %c16 = arith.constant 16 : index
    %130 = memref.load %arg1[%c16] : memref<27xf32, #tpu.memory_space<smem>>
    %131 = vector.broadcast %130 : f32 to vector<2x256xf32>
    %132 = arith.mulf %131, %125 : vector<2x256xf32>
    %133 = arith.addf %118, %132 : vector<2x256xf32>
    %c25 = arith.constant 25 : index
    %134 = memref.load %arg1[%c25] : memref<27xf32, #tpu.memory_space<smem>>
    %135 = vector.broadcast %134 : f32 to vector<2x256xf32>
    %136 = arith.mulf %135, %125 : vector<2x256xf32>
    %137 = arith.addf %122, %136 : vector<2x256xf32>
    %c239_i32 = arith.constant 239 : i32
    %138 = tpu.dynamic_rotate %11 by %c239_i32 dim 1 : vector<2x256xf32>, i32 -> vector<2x256xf32>
    %139 = arith.andi %6, %10 : vector<2x256xi1>
    %cst_15 = arith.constant 0.000000e+00 : f32
    %140 = vector.broadcast %cst_15 : f32 to vector<2x256xf32>
    %141 = arith.select %139, %138, %140 : vector<2x256xi1>, vector<2x256xf32>
    %c8 = arith.constant 8 : index
    %142 = memref.load %arg1[%c8] : memref<27xf32, #tpu.memory_space<smem>>
    %143 = vector.broadcast %142 : f32 to vector<2x256xf32>
    %144 = arith.mulf %143, %141 : vector<2x256xf32>
    %145 = arith.addf %129, %144 : vector<2x256xf32>
    %c17 = arith.constant 17 : index
    %146 = memref.load %arg1[%c17] : memref<27xf32, #tpu.memory_space<smem>>
    %147 = vector.broadcast %146 : f32 to vector<2x256xf32>
    %148 = arith.mulf %147, %141 : vector<2x256xf32>
    %149 = arith.addf %133, %148 : vector<2x256xf32>
    %c26 = arith.constant 26 : index
    %150 = memref.load %arg1[%c26] : memref<27xf32, #tpu.memory_space<smem>>
    %151 = vector.broadcast %150 : f32 to vector<2x256xf32>
    %152 = arith.mulf %151, %141 : vector<2x256xf32>
    %153 = arith.addf %137, %152 : vector<2x256xf32>
    %c0_16 = arith.constant 0 : index
    %154 = memref.load %arg3[%c0_16] : memref<12xf32, #tpu.memory_space<smem>>
    %155 = vector.broadcast %154 : f32 to vector<2x256xf32>
    %156 = arith.mulf %155, %145 : vector<2x256xf32>
    %c4_17 = arith.constant 4 : index
    %157 = memref.load %arg3[%c4_17] : memref<12xf32, #tpu.memory_space<smem>>
    %158 = vector.broadcast %157 : f32 to vector<2x256xf32>
    %159 = arith.mulf %158, %149 : vector<2x256xf32>
    %160 = arith.addf %156, %159 : vector<2x256xf32>
    %c8_18 = arith.constant 8 : index
    %161 = memref.load %arg3[%c8_18] : memref<12xf32, #tpu.memory_space<smem>>
    %162 = vector.broadcast %161 : f32 to vector<2x256xf32>
    %163 = arith.mulf %162, %153 : vector<2x256xf32>
    %164 = arith.addf %160, %163 : vector<2x256xf32>
    %c0_19 = arith.constant 0 : index
    %165 = memref.load %arg4[%c0_19] : memref<1xf32, #tpu.memory_space<smem>>
    %166 = vector.broadcast %165 : f32 to vector<2x256xf32>
    %167 = arith.addf %164, %166 : vector<2x256xf32>
    %c1_20 = arith.constant 1 : index
    %168 = memref.load %arg3[%c1_20] : memref<12xf32, #tpu.memory_space<smem>>
    %169 = vector.broadcast %168 : f32 to vector<2x256xf32>
    %170 = arith.mulf %169, %145 : vector<2x256xf32>
    %c5_21 = arith.constant 5 : index
    %171 = memref.load %arg3[%c5_21] : memref<12xf32, #tpu.memory_space<smem>>
    %172 = vector.broadcast %171 : f32 to vector<2x256xf32>
    %173 = arith.mulf %172, %149 : vector<2x256xf32>
    %174 = arith.addf %170, %173 : vector<2x256xf32>
    %c9_22 = arith.constant 9 : index
    %175 = memref.load %arg3[%c9_22] : memref<12xf32, #tpu.memory_space<smem>>
    %176 = vector.broadcast %175 : f32 to vector<2x256xf32>
    %177 = arith.mulf %176, %153 : vector<2x256xf32>
    %178 = arith.addf %174, %177 : vector<2x256xf32>
    %c255_i32_23 = arith.constant 255 : i32
    %179 = tpu.dynamic_rotate %178 by %c255_i32_23 dim 1 : vector<2x256xf32>, i32 -> vector<2x256xf32>
    %cst_24 = arith.constant 0.000000e+00 : f32
    %180 = vector.broadcast %cst_24 : f32 to vector<2x256xf32>
    %181 = arith.select %10, %179, %180 : vector<2x256xi1>, vector<2x256xf32>
    %182 = arith.addf %167, %181 : vector<2x256xf32>
    %c2_25 = arith.constant 2 : index
    %183 = memref.load %arg3[%c2_25] : memref<12xf32, #tpu.memory_space<smem>>
    %184 = vector.broadcast %183 : f32 to vector<2x256xf32>
    %185 = arith.mulf %184, %145 : vector<2x256xf32>
    %c6_26 = arith.constant 6 : index
    %186 = memref.load %arg3[%c6_26] : memref<12xf32, #tpu.memory_space<smem>>
    %187 = vector.broadcast %186 : f32 to vector<2x256xf32>
    %188 = arith.mulf %187, %149 : vector<2x256xf32>
    %189 = arith.addf %185, %188 : vector<2x256xf32>
    %c10_27 = arith.constant 10 : index
    %190 = memref.load %arg3[%c10_27] : memref<12xf32, #tpu.memory_space<smem>>
    %191 = vector.broadcast %190 : f32 to vector<2x256xf32>
    %192 = arith.mulf %191, %153 : vector<2x256xf32>
    %193 = arith.addf %189, %192 : vector<2x256xf32>
    %c240_i32_28 = arith.constant 240 : i32
    %194 = tpu.dynamic_rotate %193 by %c240_i32_28 dim 1 : vector<2x256xf32>, i32 -> vector<2x256xf32>
    %cst_29 = arith.constant 0.000000e+00 : f32
    %195 = vector.broadcast %cst_29 : f32 to vector<2x256xf32>
    %196 = arith.select %6, %194, %195 : vector<2x256xi1>, vector<2x256xf32>
    %197 = arith.addf %182, %196 : vector<2x256xf32>
    %c3_30 = arith.constant 3 : index
    %198 = memref.load %arg3[%c3_30] : memref<12xf32, #tpu.memory_space<smem>>
    %199 = vector.broadcast %198 : f32 to vector<2x256xf32>
    %200 = arith.mulf %199, %145 : vector<2x256xf32>
    %c7_31 = arith.constant 7 : index
    %201 = memref.load %arg3[%c7_31] : memref<12xf32, #tpu.memory_space<smem>>
    %202 = vector.broadcast %201 : f32 to vector<2x256xf32>
    %203 = arith.mulf %202, %149 : vector<2x256xf32>
    %204 = arith.addf %200, %203 : vector<2x256xf32>
    %c11_32 = arith.constant 11 : index
    %205 = memref.load %arg3[%c11_32] : memref<12xf32, #tpu.memory_space<smem>>
    %206 = vector.broadcast %205 : f32 to vector<2x256xf32>
    %207 = arith.mulf %206, %153 : vector<2x256xf32>
    %208 = arith.addf %204, %207 : vector<2x256xf32>
    %c239_i32_33 = arith.constant 239 : i32
    %209 = tpu.dynamic_rotate %208 by %c239_i32_33 dim 1 : vector<2x256xf32>, i32 -> vector<2x256xf32>
    %cst_34 = arith.constant 0.000000e+00 : f32
    %210 = vector.broadcast %cst_34 : f32 to vector<2x256xf32>
    %211 = arith.select %139, %209, %210 : vector<2x256xi1>, vector<2x256xf32>
    %212 = arith.addf %197, %211 : vector<2x256xf32>
    %c17_i32_35 = arith.constant 17 : i32
    %213 = tpu.dynamic_rotate %212 by %c17_i32_35 dim 1 : vector<2x256xf32>, i32 -> vector<2x256xf32>
    %cst_36 = arith.constant 0.000000e+00 : f32
    %214 = vector.broadcast %cst_36 : f32 to vector<2x256xf32>
    %215 = arith.select %13, %213, %214 : vector<2x256xi1>, vector<2x256xf32>
    %c0_37 = arith.constant 0 : index
    %216 = memref.load %arg5[%c0_37] : memref<27xf32, #tpu.memory_space<smem>>
    %217 = vector.broadcast %216 : f32 to vector<2x256xf32>
    %218 = arith.mulf %217, %215 : vector<2x256xf32>
    %c0_38 = arith.constant 0 : index
    %219 = memref.load %arg6[%c0_38] : memref<3xf32, #tpu.memory_space<smem>>
    %220 = vector.broadcast %219 : f32 to vector<2x256xf32>
    %221 = arith.addf %218, %220 : vector<2x256xf32>
    %c9_39 = arith.constant 9 : index
    %222 = memref.load %arg5[%c9_39] : memref<27xf32, #tpu.memory_space<smem>>
    %223 = vector.broadcast %222 : f32 to vector<2x256xf32>
    %224 = arith.mulf %223, %215 : vector<2x256xf32>
    %c1_40 = arith.constant 1 : index
    %225 = memref.load %arg6[%c1_40] : memref<3xf32, #tpu.memory_space<smem>>
    %226 = vector.broadcast %225 : f32 to vector<2x256xf32>
    %227 = arith.addf %224, %226 : vector<2x256xf32>
    %c18_41 = arith.constant 18 : index
    %228 = memref.load %arg5[%c18_41] : memref<27xf32, #tpu.memory_space<smem>>
    %229 = vector.broadcast %228 : f32 to vector<2x256xf32>
    %230 = arith.mulf %229, %215 : vector<2x256xf32>
    %c2_42 = arith.constant 2 : index
    %231 = memref.load %arg6[%c2_42] : memref<3xf32, #tpu.memory_space<smem>>
    %232 = vector.broadcast %231 : f32 to vector<2x256xf32>
    %233 = arith.addf %230, %232 : vector<2x256xf32>
    %c16_i32_43 = arith.constant 16 : i32
    %234 = tpu.dynamic_rotate %212 by %c16_i32_43 dim 1 : vector<2x256xf32>, i32 -> vector<2x256xf32>
    %cst_44 = arith.constant 0.000000e+00 : f32
    %235 = vector.broadcast %cst_44 : f32 to vector<2x256xf32>
    %236 = arith.select %4, %234, %235 : vector<2x256xi1>, vector<2x256xf32>
    %c1_45 = arith.constant 1 : index
    %237 = memref.load %arg5[%c1_45] : memref<27xf32, #tpu.memory_space<smem>>
    %238 = vector.broadcast %237 : f32 to vector<2x256xf32>
    %239 = arith.mulf %238, %236 : vector<2x256xf32>
    %240 = arith.addf %221, %239 : vector<2x256xf32>
    %c10_46 = arith.constant 10 : index
    %241 = memref.load %arg5[%c10_46] : memref<27xf32, #tpu.memory_space<smem>>
    %242 = vector.broadcast %241 : f32 to vector<2x256xf32>
    %243 = arith.mulf %242, %236 : vector<2x256xf32>
    %244 = arith.addf %227, %243 : vector<2x256xf32>
    %c19_47 = arith.constant 19 : index
    %245 = memref.load %arg5[%c19_47] : memref<27xf32, #tpu.memory_space<smem>>
    %246 = vector.broadcast %245 : f32 to vector<2x256xf32>
    %247 = arith.mulf %246, %236 : vector<2x256xf32>
    %248 = arith.addf %233, %247 : vector<2x256xf32>
    %c15_i32_48 = arith.constant 15 : i32
    %249 = tpu.dynamic_rotate %212 by %c15_i32_48 dim 1 : vector<2x256xf32>, i32 -> vector<2x256xf32>
    %cst_49 = arith.constant 0.000000e+00 : f32
    %250 = vector.broadcast %cst_49 : f32 to vector<2x256xf32>
    %251 = arith.select %50, %249, %250 : vector<2x256xi1>, vector<2x256xf32>
    %c2_50 = arith.constant 2 : index
    %252 = memref.load %arg5[%c2_50] : memref<27xf32, #tpu.memory_space<smem>>
    %253 = vector.broadcast %252 : f32 to vector<2x256xf32>
    %254 = arith.mulf %253, %251 : vector<2x256xf32>
    %255 = arith.addf %240, %254 : vector<2x256xf32>
    %c11_51 = arith.constant 11 : index
    %256 = memref.load %arg5[%c11_51] : memref<27xf32, #tpu.memory_space<smem>>
    %257 = vector.broadcast %256 : f32 to vector<2x256xf32>
    %258 = arith.mulf %257, %251 : vector<2x256xf32>
    %259 = arith.addf %244, %258 : vector<2x256xf32>
    %c20_52 = arith.constant 20 : index
    %260 = memref.load %arg5[%c20_52] : memref<27xf32, #tpu.memory_space<smem>>
    %261 = vector.broadcast %260 : f32 to vector<2x256xf32>
    %262 = arith.mulf %261, %251 : vector<2x256xf32>
    %263 = arith.addf %248, %262 : vector<2x256xf32>
    %c1_i32_53 = arith.constant 1 : i32
    %264 = tpu.dynamic_rotate %212 by %c1_i32_53 dim 1 : vector<2x256xf32>, i32 -> vector<2x256xf32>
    %cst_54 = arith.constant 0.000000e+00 : f32
    %265 = vector.broadcast %cst_54 : f32 to vector<2x256xf32>
    %266 = arith.select %8, %264, %265 : vector<2x256xi1>, vector<2x256xf32>
    %c3_55 = arith.constant 3 : index
    %267 = memref.load %arg5[%c3_55] : memref<27xf32, #tpu.memory_space<smem>>
    %268 = vector.broadcast %267 : f32 to vector<2x256xf32>
    %269 = arith.mulf %268, %266 : vector<2x256xf32>
    %270 = arith.addf %255, %269 : vector<2x256xf32>
    %c12_56 = arith.constant 12 : index
    %271 = memref.load %arg5[%c12_56] : memref<27xf32, #tpu.memory_space<smem>>
    %272 = vector.broadcast %271 : f32 to vector<2x256xf32>
    %273 = arith.mulf %272, %266 : vector<2x256xf32>
    %274 = arith.addf %259, %273 : vector<2x256xf32>
    %c21_57 = arith.constant 21 : index
    %275 = memref.load %arg5[%c21_57] : memref<27xf32, #tpu.memory_space<smem>>
    %276 = vector.broadcast %275 : f32 to vector<2x256xf32>
    %277 = arith.mulf %276, %266 : vector<2x256xf32>
    %278 = arith.addf %263, %277 : vector<2x256xf32>
    %c4_58 = arith.constant 4 : index
    %279 = memref.load %arg5[%c4_58] : memref<27xf32, #tpu.memory_space<smem>>
    %280 = vector.broadcast %279 : f32 to vector<2x256xf32>
    %281 = arith.mulf %280, %212 : vector<2x256xf32>
    %282 = arith.addf %270, %281 : vector<2x256xf32>
    %c13_59 = arith.constant 13 : index
    %283 = memref.load %arg5[%c13_59] : memref<27xf32, #tpu.memory_space<smem>>
    %284 = vector.broadcast %283 : f32 to vector<2x256xf32>
    %285 = arith.mulf %284, %212 : vector<2x256xf32>
    %286 = arith.addf %274, %285 : vector<2x256xf32>
    %c22_60 = arith.constant 22 : index
    %287 = memref.load %arg5[%c22_60] : memref<27xf32, #tpu.memory_space<smem>>
    %288 = vector.broadcast %287 : f32 to vector<2x256xf32>
    %289 = arith.mulf %288, %212 : vector<2x256xf32>
    %290 = arith.addf %278, %289 : vector<2x256xf32>
    %c255_i32_61 = arith.constant 255 : i32
    %291 = tpu.dynamic_rotate %212 by %c255_i32_61 dim 1 : vector<2x256xf32>, i32 -> vector<2x256xf32>
    %cst_62 = arith.constant 0.000000e+00 : f32
    %292 = vector.broadcast %cst_62 : f32 to vector<2x256xf32>
    %293 = arith.select %10, %291, %292 : vector<2x256xi1>, vector<2x256xf32>
    %c5_63 = arith.constant 5 : index
    %294 = memref.load %arg5[%c5_63] : memref<27xf32, #tpu.memory_space<smem>>
    %295 = vector.broadcast %294 : f32 to vector<2x256xf32>
    %296 = arith.mulf %295, %293 : vector<2x256xf32>
    %297 = arith.addf %282, %296 : vector<2x256xf32>
    %c14_64 = arith.constant 14 : index
    %298 = memref.load %arg5[%c14_64] : memref<27xf32, #tpu.memory_space<smem>>
    %299 = vector.broadcast %298 : f32 to vector<2x256xf32>
    %300 = arith.mulf %299, %293 : vector<2x256xf32>
    %301 = arith.addf %286, %300 : vector<2x256xf32>
    %c23_65 = arith.constant 23 : index
    %302 = memref.load %arg5[%c23_65] : memref<27xf32, #tpu.memory_space<smem>>
    %303 = vector.broadcast %302 : f32 to vector<2x256xf32>
    %304 = arith.mulf %303, %293 : vector<2x256xf32>
    %305 = arith.addf %290, %304 : vector<2x256xf32>
    %c241_i32_66 = arith.constant 241 : i32
    %306 = tpu.dynamic_rotate %212 by %c241_i32_66 dim 1 : vector<2x256xf32>, i32 -> vector<2x256xf32>
    %cst_67 = arith.constant 0.000000e+00 : f32
    %307 = vector.broadcast %cst_67 : f32 to vector<2x256xf32>
    %308 = arith.select %108, %306, %307 : vector<2x256xi1>, vector<2x256xf32>
    %c6_68 = arith.constant 6 : index
    %309 = memref.load %arg5[%c6_68] : memref<27xf32, #tpu.memory_space<smem>>
    %310 = vector.broadcast %309 : f32 to vector<2x256xf32>
    %311 = arith.mulf %310, %308 : vector<2x256xf32>
    %312 = arith.addf %297, %311 : vector<2x256xf32>
    %c15_69 = arith.constant 15 : index
    %313 = memref.load %arg5[%c15_69] : memref<27xf32, #tpu.memory_space<smem>>
    %314 = vector.broadcast %313 : f32 to vector<2x256xf32>
    %315 = arith.mulf %314, %308 : vector<2x256xf32>
    %316 = arith.addf %301, %315 : vector<2x256xf32>
    %c24_70 = arith.constant 24 : index
    %317 = memref.load %arg5[%c24_70] : memref<27xf32, #tpu.memory_space<smem>>
    %318 = vector.broadcast %317 : f32 to vector<2x256xf32>
    %319 = arith.mulf %318, %308 : vector<2x256xf32>
    %320 = arith.addf %305, %319 : vector<2x256xf32>
    %c240_i32_71 = arith.constant 240 : i32
    %321 = tpu.dynamic_rotate %212 by %c240_i32_71 dim 1 : vector<2x256xf32>, i32 -> vector<2x256xf32>
    %cst_72 = arith.constant 0.000000e+00 : f32
    %322 = vector.broadcast %cst_72 : f32 to vector<2x256xf32>
    %323 = arith.select %6, %321, %322 : vector<2x256xi1>, vector<2x256xf32>
    %c7_73 = arith.constant 7 : index
    %324 = memref.load %arg5[%c7_73] : memref<27xf32, #tpu.memory_space<smem>>
    %325 = vector.broadcast %324 : f32 to vector<2x256xf32>
    %326 = arith.mulf %325, %323 : vector<2x256xf32>
    %327 = arith.addf %312, %326 : vector<2x256xf32>
    %c16_74 = arith.constant 16 : index
    %328 = memref.load %arg5[%c16_74] : memref<27xf32, #tpu.memory_space<smem>>
    %329 = vector.broadcast %328 : f32 to vector<2x256xf32>
    %330 = arith.mulf %329, %323 : vector<2x256xf32>
    %331 = arith.addf %316, %330 : vector<2x256xf32>
    %c25_75 = arith.constant 25 : index
    %332 = memref.load %arg5[%c25_75] : memref<27xf32, #tpu.memory_space<smem>>
    %333 = vector.broadcast %332 : f32 to vector<2x256xf32>
    %334 = arith.mulf %333, %323 : vector<2x256xf32>
    %335 = arith.addf %320, %334 : vector<2x256xf32>
    %c239_i32_76 = arith.constant 239 : i32
    %336 = tpu.dynamic_rotate %212 by %c239_i32_76 dim 1 : vector<2x256xf32>, i32 -> vector<2x256xf32>
    %cst_77 = arith.constant 0.000000e+00 : f32
    %337 = vector.broadcast %cst_77 : f32 to vector<2x256xf32>
    %338 = arith.select %139, %336, %337 : vector<2x256xi1>, vector<2x256xf32>
    %c8_78 = arith.constant 8 : index
    %339 = memref.load %arg5[%c8_78] : memref<27xf32, #tpu.memory_space<smem>>
    %340 = vector.broadcast %339 : f32 to vector<2x256xf32>
    %341 = arith.mulf %340, %338 : vector<2x256xf32>
    %342 = arith.addf %327, %341 : vector<2x256xf32>
    %c17_79 = arith.constant 17 : index
    %343 = memref.load %arg5[%c17_79] : memref<27xf32, #tpu.memory_space<smem>>
    %344 = vector.broadcast %343 : f32 to vector<2x256xf32>
    %345 = arith.mulf %344, %338 : vector<2x256xf32>
    %346 = arith.addf %331, %345 : vector<2x256xf32>
    %c26_80 = arith.constant 26 : index
    %347 = memref.load %arg5[%c26_80] : memref<27xf32, #tpu.memory_space<smem>>
    %348 = vector.broadcast %347 : f32 to vector<2x256xf32>
    %349 = arith.mulf %348, %338 : vector<2x256xf32>
    %350 = arith.addf %335, %349 : vector<2x256xf32>
    %c0_81 = arith.constant 0 : index
    %351 = memref.load %arg7[%c0_81] : memref<12xf32, #tpu.memory_space<smem>>
    %352 = vector.broadcast %351 : f32 to vector<2x256xf32>
    %353 = arith.mulf %352, %342 : vector<2x256xf32>
    %c4_82 = arith.constant 4 : index
    %354 = memref.load %arg7[%c4_82] : memref<12xf32, #tpu.memory_space<smem>>
    %355 = vector.broadcast %354 : f32 to vector<2x256xf32>
    %356 = arith.mulf %355, %346 : vector<2x256xf32>
    %357 = arith.addf %353, %356 : vector<2x256xf32>
    %c8_83 = arith.constant 8 : index
    %358 = memref.load %arg7[%c8_83] : memref<12xf32, #tpu.memory_space<smem>>
    %359 = vector.broadcast %358 : f32 to vector<2x256xf32>
    %360 = arith.mulf %359, %350 : vector<2x256xf32>
    %361 = arith.addf %357, %360 : vector<2x256xf32>
    %c0_84 = arith.constant 0 : index
    %362 = memref.load %arg8[%c0_84] : memref<1xf32, #tpu.memory_space<smem>>
    %363 = vector.broadcast %362 : f32 to vector<2x256xf32>
    %364 = arith.addf %361, %363 : vector<2x256xf32>
    %c1_85 = arith.constant 1 : index
    %365 = memref.load %arg7[%c1_85] : memref<12xf32, #tpu.memory_space<smem>>
    %366 = vector.broadcast %365 : f32 to vector<2x256xf32>
    %367 = arith.mulf %366, %342 : vector<2x256xf32>
    %c5_86 = arith.constant 5 : index
    %368 = memref.load %arg7[%c5_86] : memref<12xf32, #tpu.memory_space<smem>>
    %369 = vector.broadcast %368 : f32 to vector<2x256xf32>
    %370 = arith.mulf %369, %346 : vector<2x256xf32>
    %371 = arith.addf %367, %370 : vector<2x256xf32>
    %c9_87 = arith.constant 9 : index
    %372 = memref.load %arg7[%c9_87] : memref<12xf32, #tpu.memory_space<smem>>
    %373 = vector.broadcast %372 : f32 to vector<2x256xf32>
    %374 = arith.mulf %373, %350 : vector<2x256xf32>
    %375 = arith.addf %371, %374 : vector<2x256xf32>
    %c255_i32_88 = arith.constant 255 : i32
    %376 = tpu.dynamic_rotate %375 by %c255_i32_88 dim 1 : vector<2x256xf32>, i32 -> vector<2x256xf32>
    %cst_89 = arith.constant 0.000000e+00 : f32
    %377 = vector.broadcast %cst_89 : f32 to vector<2x256xf32>
    %378 = arith.select %10, %376, %377 : vector<2x256xi1>, vector<2x256xf32>
    %379 = arith.addf %364, %378 : vector<2x256xf32>
    %c2_90 = arith.constant 2 : index
    %380 = memref.load %arg7[%c2_90] : memref<12xf32, #tpu.memory_space<smem>>
    %381 = vector.broadcast %380 : f32 to vector<2x256xf32>
    %382 = arith.mulf %381, %342 : vector<2x256xf32>
    %c6_91 = arith.constant 6 : index
    %383 = memref.load %arg7[%c6_91] : memref<12xf32, #tpu.memory_space<smem>>
    %384 = vector.broadcast %383 : f32 to vector<2x256xf32>
    %385 = arith.mulf %384, %346 : vector<2x256xf32>
    %386 = arith.addf %382, %385 : vector<2x256xf32>
    %c10_92 = arith.constant 10 : index
    %387 = memref.load %arg7[%c10_92] : memref<12xf32, #tpu.memory_space<smem>>
    %388 = vector.broadcast %387 : f32 to vector<2x256xf32>
    %389 = arith.mulf %388, %350 : vector<2x256xf32>
    %390 = arith.addf %386, %389 : vector<2x256xf32>
    %c240_i32_93 = arith.constant 240 : i32
    %391 = tpu.dynamic_rotate %390 by %c240_i32_93 dim 1 : vector<2x256xf32>, i32 -> vector<2x256xf32>
    %cst_94 = arith.constant 0.000000e+00 : f32
    %392 = vector.broadcast %cst_94 : f32 to vector<2x256xf32>
    %393 = arith.select %6, %391, %392 : vector<2x256xi1>, vector<2x256xf32>
    %394 = arith.addf %379, %393 : vector<2x256xf32>
    %c3_95 = arith.constant 3 : index
    %395 = memref.load %arg7[%c3_95] : memref<12xf32, #tpu.memory_space<smem>>
    %396 = vector.broadcast %395 : f32 to vector<2x256xf32>
    %397 = arith.mulf %396, %342 : vector<2x256xf32>
    %c7_96 = arith.constant 7 : index
    %398 = memref.load %arg7[%c7_96] : memref<12xf32, #tpu.memory_space<smem>>
    %399 = vector.broadcast %398 : f32 to vector<2x256xf32>
    %400 = arith.mulf %399, %346 : vector<2x256xf32>
    %401 = arith.addf %397, %400 : vector<2x256xf32>
    %c11_97 = arith.constant 11 : index
    %402 = memref.load %arg7[%c11_97] : memref<12xf32, #tpu.memory_space<smem>>
    %403 = vector.broadcast %402 : f32 to vector<2x256xf32>
    %404 = arith.mulf %403, %350 : vector<2x256xf32>
    %405 = arith.addf %401, %404 : vector<2x256xf32>
    %c239_i32_98 = arith.constant 239 : i32
    %406 = tpu.dynamic_rotate %405 by %c239_i32_98 dim 1 : vector<2x256xf32>, i32 -> vector<2x256xf32>
    %cst_99 = arith.constant 0.000000e+00 : f32
    %407 = vector.broadcast %cst_99 : f32 to vector<2x256xf32>
    %408 = arith.select %139, %406, %407 : vector<2x256xi1>, vector<2x256xf32>
    %409 = arith.addf %394, %408 : vector<2x256xf32>
    %c17_i32_100 = arith.constant 17 : i32
    %410 = tpu.dynamic_rotate %409 by %c17_i32_100 dim 1 : vector<2x256xf32>, i32 -> vector<2x256xf32>
    %cst_101 = arith.constant 0.000000e+00 : f32
    %411 = vector.broadcast %cst_101 : f32 to vector<2x256xf32>
    %412 = arith.select %13, %410, %411 : vector<2x256xi1>, vector<2x256xf32>
    %c0_102 = arith.constant 0 : index
    %413 = memref.load %arg9[%c0_102] : memref<27xf32, #tpu.memory_space<smem>>
    %414 = vector.broadcast %413 : f32 to vector<2x256xf32>
    %415 = arith.mulf %414, %412 : vector<2x256xf32>
    %c0_103 = arith.constant 0 : index
    %416 = memref.load %arg10[%c0_103] : memref<3xf32, #tpu.memory_space<smem>>
    %417 = vector.broadcast %416 : f32 to vector<2x256xf32>
    %418 = arith.addf %415, %417 : vector<2x256xf32>
    %c9_104 = arith.constant 9 : index
    %419 = memref.load %arg9[%c9_104] : memref<27xf32, #tpu.memory_space<smem>>
    %420 = vector.broadcast %419 : f32 to vector<2x256xf32>
    %421 = arith.mulf %420, %412 : vector<2x256xf32>
    %c1_105 = arith.constant 1 : index
    %422 = memref.load %arg10[%c1_105] : memref<3xf32, #tpu.memory_space<smem>>
    %423 = vector.broadcast %422 : f32 to vector<2x256xf32>
    %424 = arith.addf %421, %423 : vector<2x256xf32>
    %c18_106 = arith.constant 18 : index
    %425 = memref.load %arg9[%c18_106] : memref<27xf32, #tpu.memory_space<smem>>
    %426 = vector.broadcast %425 : f32 to vector<2x256xf32>
    %427 = arith.mulf %426, %412 : vector<2x256xf32>
    %c2_107 = arith.constant 2 : index
    %428 = memref.load %arg10[%c2_107] : memref<3xf32, #tpu.memory_space<smem>>
    %429 = vector.broadcast %428 : f32 to vector<2x256xf32>
    %430 = arith.addf %427, %429 : vector<2x256xf32>
    %c16_i32_108 = arith.constant 16 : i32
    %431 = tpu.dynamic_rotate %409 by %c16_i32_108 dim 1 : vector<2x256xf32>, i32 -> vector<2x256xf32>
    %cst_109 = arith.constant 0.000000e+00 : f32
    %432 = vector.broadcast %cst_109 : f32 to vector<2x256xf32>
    %433 = arith.select %4, %431, %432 : vector<2x256xi1>, vector<2x256xf32>
    %c1_110 = arith.constant 1 : index
    %434 = memref.load %arg9[%c1_110] : memref<27xf32, #tpu.memory_space<smem>>
    %435 = vector.broadcast %434 : f32 to vector<2x256xf32>
    %436 = arith.mulf %435, %433 : vector<2x256xf32>
    %437 = arith.addf %418, %436 : vector<2x256xf32>
    %c10_111 = arith.constant 10 : index
    %438 = memref.load %arg9[%c10_111] : memref<27xf32, #tpu.memory_space<smem>>
    %439 = vector.broadcast %438 : f32 to vector<2x256xf32>
    %440 = arith.mulf %439, %433 : vector<2x256xf32>
    %441 = arith.addf %424, %440 : vector<2x256xf32>
    %c19_112 = arith.constant 19 : index
    %442 = memref.load %arg9[%c19_112] : memref<27xf32, #tpu.memory_space<smem>>
    %443 = vector.broadcast %442 : f32 to vector<2x256xf32>
    %444 = arith.mulf %443, %433 : vector<2x256xf32>
    %445 = arith.addf %430, %444 : vector<2x256xf32>
    %c15_i32_113 = arith.constant 15 : i32
    %446 = tpu.dynamic_rotate %409 by %c15_i32_113 dim 1 : vector<2x256xf32>, i32 -> vector<2x256xf32>
    %cst_114 = arith.constant 0.000000e+00 : f32
    %447 = vector.broadcast %cst_114 : f32 to vector<2x256xf32>
    %448 = arith.select %50, %446, %447 : vector<2x256xi1>, vector<2x256xf32>
    %c2_115 = arith.constant 2 : index
    %449 = memref.load %arg9[%c2_115] : memref<27xf32, #tpu.memory_space<smem>>
    %450 = vector.broadcast %449 : f32 to vector<2x256xf32>
    %451 = arith.mulf %450, %448 : vector<2x256xf32>
    %452 = arith.addf %437, %451 : vector<2x256xf32>
    %c11_116 = arith.constant 11 : index
    %453 = memref.load %arg9[%c11_116] : memref<27xf32, #tpu.memory_space<smem>>
    %454 = vector.broadcast %453 : f32 to vector<2x256xf32>
    %455 = arith.mulf %454, %448 : vector<2x256xf32>
    %456 = arith.addf %441, %455 : vector<2x256xf32>
    %c20_117 = arith.constant 20 : index
    %457 = memref.load %arg9[%c20_117] : memref<27xf32, #tpu.memory_space<smem>>
    %458 = vector.broadcast %457 : f32 to vector<2x256xf32>
    %459 = arith.mulf %458, %448 : vector<2x256xf32>
    %460 = arith.addf %445, %459 : vector<2x256xf32>
    %c1_i32_118 = arith.constant 1 : i32
    %461 = tpu.dynamic_rotate %409 by %c1_i32_118 dim 1 : vector<2x256xf32>, i32 -> vector<2x256xf32>
    %cst_119 = arith.constant 0.000000e+00 : f32
    %462 = vector.broadcast %cst_119 : f32 to vector<2x256xf32>
    %463 = arith.select %8, %461, %462 : vector<2x256xi1>, vector<2x256xf32>
    %c3_120 = arith.constant 3 : index
    %464 = memref.load %arg9[%c3_120] : memref<27xf32, #tpu.memory_space<smem>>
    %465 = vector.broadcast %464 : f32 to vector<2x256xf32>
    %466 = arith.mulf %465, %463 : vector<2x256xf32>
    %467 = arith.addf %452, %466 : vector<2x256xf32>
    %c12_121 = arith.constant 12 : index
    %468 = memref.load %arg9[%c12_121] : memref<27xf32, #tpu.memory_space<smem>>
    %469 = vector.broadcast %468 : f32 to vector<2x256xf32>
    %470 = arith.mulf %469, %463 : vector<2x256xf32>
    %471 = arith.addf %456, %470 : vector<2x256xf32>
    %c21_122 = arith.constant 21 : index
    %472 = memref.load %arg9[%c21_122] : memref<27xf32, #tpu.memory_space<smem>>
    %473 = vector.broadcast %472 : f32 to vector<2x256xf32>
    %474 = arith.mulf %473, %463 : vector<2x256xf32>
    %475 = arith.addf %460, %474 : vector<2x256xf32>
    %c4_123 = arith.constant 4 : index
    %476 = memref.load %arg9[%c4_123] : memref<27xf32, #tpu.memory_space<smem>>
    %477 = vector.broadcast %476 : f32 to vector<2x256xf32>
    %478 = arith.mulf %477, %409 : vector<2x256xf32>
    %479 = arith.addf %467, %478 : vector<2x256xf32>
    %c13_124 = arith.constant 13 : index
    %480 = memref.load %arg9[%c13_124] : memref<27xf32, #tpu.memory_space<smem>>
    %481 = vector.broadcast %480 : f32 to vector<2x256xf32>
    %482 = arith.mulf %481, %409 : vector<2x256xf32>
    %483 = arith.addf %471, %482 : vector<2x256xf32>
    %c22_125 = arith.constant 22 : index
    %484 = memref.load %arg9[%c22_125] : memref<27xf32, #tpu.memory_space<smem>>
    %485 = vector.broadcast %484 : f32 to vector<2x256xf32>
    %486 = arith.mulf %485, %409 : vector<2x256xf32>
    %487 = arith.addf %475, %486 : vector<2x256xf32>
    %c255_i32_126 = arith.constant 255 : i32
    %488 = tpu.dynamic_rotate %409 by %c255_i32_126 dim 1 : vector<2x256xf32>, i32 -> vector<2x256xf32>
    %cst_127 = arith.constant 0.000000e+00 : f32
    %489 = vector.broadcast %cst_127 : f32 to vector<2x256xf32>
    %490 = arith.select %10, %488, %489 : vector<2x256xi1>, vector<2x256xf32>
    %c5_128 = arith.constant 5 : index
    %491 = memref.load %arg9[%c5_128] : memref<27xf32, #tpu.memory_space<smem>>
    %492 = vector.broadcast %491 : f32 to vector<2x256xf32>
    %493 = arith.mulf %492, %490 : vector<2x256xf32>
    %494 = arith.addf %479, %493 : vector<2x256xf32>
    %c14_129 = arith.constant 14 : index
    %495 = memref.load %arg9[%c14_129] : memref<27xf32, #tpu.memory_space<smem>>
    %496 = vector.broadcast %495 : f32 to vector<2x256xf32>
    %497 = arith.mulf %496, %490 : vector<2x256xf32>
    %498 = arith.addf %483, %497 : vector<2x256xf32>
    %c23_130 = arith.constant 23 : index
    %499 = memref.load %arg9[%c23_130] : memref<27xf32, #tpu.memory_space<smem>>
    %500 = vector.broadcast %499 : f32 to vector<2x256xf32>
    %501 = arith.mulf %500, %490 : vector<2x256xf32>
    %502 = arith.addf %487, %501 : vector<2x256xf32>
    %c241_i32_131 = arith.constant 241 : i32
    %503 = tpu.dynamic_rotate %409 by %c241_i32_131 dim 1 : vector<2x256xf32>, i32 -> vector<2x256xf32>
    %cst_132 = arith.constant 0.000000e+00 : f32
    %504 = vector.broadcast %cst_132 : f32 to vector<2x256xf32>
    %505 = arith.select %108, %503, %504 : vector<2x256xi1>, vector<2x256xf32>
    %c6_133 = arith.constant 6 : index
    %506 = memref.load %arg9[%c6_133] : memref<27xf32, #tpu.memory_space<smem>>
    %507 = vector.broadcast %506 : f32 to vector<2x256xf32>
    %508 = arith.mulf %507, %505 : vector<2x256xf32>
    %509 = arith.addf %494, %508 : vector<2x256xf32>
    %c15_134 = arith.constant 15 : index
    %510 = memref.load %arg9[%c15_134] : memref<27xf32, #tpu.memory_space<smem>>
    %511 = vector.broadcast %510 : f32 to vector<2x256xf32>
    %512 = arith.mulf %511, %505 : vector<2x256xf32>
    %513 = arith.addf %498, %512 : vector<2x256xf32>
    %c24_135 = arith.constant 24 : index
    %514 = memref.load %arg9[%c24_135] : memref<27xf32, #tpu.memory_space<smem>>
    %515 = vector.broadcast %514 : f32 to vector<2x256xf32>
    %516 = arith.mulf %515, %505 : vector<2x256xf32>
    %517 = arith.addf %502, %516 : vector<2x256xf32>
    %c240_i32_136 = arith.constant 240 : i32
    %518 = tpu.dynamic_rotate %409 by %c240_i32_136 dim 1 : vector<2x256xf32>, i32 -> vector<2x256xf32>
    %cst_137 = arith.constant 0.000000e+00 : f32
    %519 = vector.broadcast %cst_137 : f32 to vector<2x256xf32>
    %520 = arith.select %6, %518, %519 : vector<2x256xi1>, vector<2x256xf32>
    %c7_138 = arith.constant 7 : index
    %521 = memref.load %arg9[%c7_138] : memref<27xf32, #tpu.memory_space<smem>>
    %522 = vector.broadcast %521 : f32 to vector<2x256xf32>
    %523 = arith.mulf %522, %520 : vector<2x256xf32>
    %524 = arith.addf %509, %523 : vector<2x256xf32>
    %c16_139 = arith.constant 16 : index
    %525 = memref.load %arg9[%c16_139] : memref<27xf32, #tpu.memory_space<smem>>
    %526 = vector.broadcast %525 : f32 to vector<2x256xf32>
    %527 = arith.mulf %526, %520 : vector<2x256xf32>
    %528 = arith.addf %513, %527 : vector<2x256xf32>
    %c25_140 = arith.constant 25 : index
    %529 = memref.load %arg9[%c25_140] : memref<27xf32, #tpu.memory_space<smem>>
    %530 = vector.broadcast %529 : f32 to vector<2x256xf32>
    %531 = arith.mulf %530, %520 : vector<2x256xf32>
    %532 = arith.addf %517, %531 : vector<2x256xf32>
    %c239_i32_141 = arith.constant 239 : i32
    %533 = tpu.dynamic_rotate %409 by %c239_i32_141 dim 1 : vector<2x256xf32>, i32 -> vector<2x256xf32>
    %cst_142 = arith.constant 0.000000e+00 : f32
    %534 = vector.broadcast %cst_142 : f32 to vector<2x256xf32>
    %535 = arith.select %139, %533, %534 : vector<2x256xi1>, vector<2x256xf32>
    %c8_143 = arith.constant 8 : index
    %536 = memref.load %arg9[%c8_143] : memref<27xf32, #tpu.memory_space<smem>>
    %537 = vector.broadcast %536 : f32 to vector<2x256xf32>
    %538 = arith.mulf %537, %535 : vector<2x256xf32>
    %539 = arith.addf %524, %538 : vector<2x256xf32>
    %c17_144 = arith.constant 17 : index
    %540 = memref.load %arg9[%c17_144] : memref<27xf32, #tpu.memory_space<smem>>
    %541 = vector.broadcast %540 : f32 to vector<2x256xf32>
    %542 = arith.mulf %541, %535 : vector<2x256xf32>
    %543 = arith.addf %528, %542 : vector<2x256xf32>
    %c26_145 = arith.constant 26 : index
    %544 = memref.load %arg9[%c26_145] : memref<27xf32, #tpu.memory_space<smem>>
    %545 = vector.broadcast %544 : f32 to vector<2x256xf32>
    %546 = arith.mulf %545, %535 : vector<2x256xf32>
    %547 = arith.addf %532, %546 : vector<2x256xf32>
    %c0_146 = arith.constant 0 : index
    %548 = memref.load %arg11[%c0_146] : memref<12xf32, #tpu.memory_space<smem>>
    %549 = vector.broadcast %548 : f32 to vector<2x256xf32>
    %550 = arith.mulf %549, %539 : vector<2x256xf32>
    %c4_147 = arith.constant 4 : index
    %551 = memref.load %arg11[%c4_147] : memref<12xf32, #tpu.memory_space<smem>>
    %552 = vector.broadcast %551 : f32 to vector<2x256xf32>
    %553 = arith.mulf %552, %543 : vector<2x256xf32>
    %554 = arith.addf %550, %553 : vector<2x256xf32>
    %c8_148 = arith.constant 8 : index
    %555 = memref.load %arg11[%c8_148] : memref<12xf32, #tpu.memory_space<smem>>
    %556 = vector.broadcast %555 : f32 to vector<2x256xf32>
    %557 = arith.mulf %556, %547 : vector<2x256xf32>
    %558 = arith.addf %554, %557 : vector<2x256xf32>
    %c0_149 = arith.constant 0 : index
    %559 = memref.load %arg12[%c0_149] : memref<1xf32, #tpu.memory_space<smem>>
    %560 = vector.broadcast %559 : f32 to vector<2x256xf32>
    %561 = arith.addf %558, %560 : vector<2x256xf32>
    %c1_150 = arith.constant 1 : index
    %562 = memref.load %arg11[%c1_150] : memref<12xf32, #tpu.memory_space<smem>>
    %563 = vector.broadcast %562 : f32 to vector<2x256xf32>
    %564 = arith.mulf %563, %539 : vector<2x256xf32>
    %c5_151 = arith.constant 5 : index
    %565 = memref.load %arg11[%c5_151] : memref<12xf32, #tpu.memory_space<smem>>
    %566 = vector.broadcast %565 : f32 to vector<2x256xf32>
    %567 = arith.mulf %566, %543 : vector<2x256xf32>
    %568 = arith.addf %564, %567 : vector<2x256xf32>
    %c9_152 = arith.constant 9 : index
    %569 = memref.load %arg11[%c9_152] : memref<12xf32, #tpu.memory_space<smem>>
    %570 = vector.broadcast %569 : f32 to vector<2x256xf32>
    %571 = arith.mulf %570, %547 : vector<2x256xf32>
    %572 = arith.addf %568, %571 : vector<2x256xf32>
    %c255_i32_153 = arith.constant 255 : i32
    %573 = tpu.dynamic_rotate %572 by %c255_i32_153 dim 1 : vector<2x256xf32>, i32 -> vector<2x256xf32>
    %cst_154 = arith.constant 0.000000e+00 : f32
    %574 = vector.broadcast %cst_154 : f32 to vector<2x256xf32>
    %575 = arith.select %10, %573, %574 : vector<2x256xi1>, vector<2x256xf32>
    %576 = arith.addf %561, %575 : vector<2x256xf32>
    %c2_155 = arith.constant 2 : index
    %577 = memref.load %arg11[%c2_155] : memref<12xf32, #tpu.memory_space<smem>>
    %578 = vector.broadcast %577 : f32 to vector<2x256xf32>
    %579 = arith.mulf %578, %539 : vector<2x256xf32>
    %c6_156 = arith.constant 6 : index
    %580 = memref.load %arg11[%c6_156] : memref<12xf32, #tpu.memory_space<smem>>
    %581 = vector.broadcast %580 : f32 to vector<2x256xf32>
    %582 = arith.mulf %581, %543 : vector<2x256xf32>
    %583 = arith.addf %579, %582 : vector<2x256xf32>
    %c10_157 = arith.constant 10 : index
    %584 = memref.load %arg11[%c10_157] : memref<12xf32, #tpu.memory_space<smem>>
    %585 = vector.broadcast %584 : f32 to vector<2x256xf32>
    %586 = arith.mulf %585, %547 : vector<2x256xf32>
    %587 = arith.addf %583, %586 : vector<2x256xf32>
    %c240_i32_158 = arith.constant 240 : i32
    %588 = tpu.dynamic_rotate %587 by %c240_i32_158 dim 1 : vector<2x256xf32>, i32 -> vector<2x256xf32>
    %cst_159 = arith.constant 0.000000e+00 : f32
    %589 = vector.broadcast %cst_159 : f32 to vector<2x256xf32>
    %590 = arith.select %6, %588, %589 : vector<2x256xi1>, vector<2x256xf32>
    %591 = arith.addf %576, %590 : vector<2x256xf32>
    %c3_160 = arith.constant 3 : index
    %592 = memref.load %arg11[%c3_160] : memref<12xf32, #tpu.memory_space<smem>>
    %593 = vector.broadcast %592 : f32 to vector<2x256xf32>
    %594 = arith.mulf %593, %539 : vector<2x256xf32>
    %c7_161 = arith.constant 7 : index
    %595 = memref.load %arg11[%c7_161] : memref<12xf32, #tpu.memory_space<smem>>
    %596 = vector.broadcast %595 : f32 to vector<2x256xf32>
    %597 = arith.mulf %596, %543 : vector<2x256xf32>
    %598 = arith.addf %594, %597 : vector<2x256xf32>
    %c11_162 = arith.constant 11 : index
    %599 = memref.load %arg11[%c11_162] : memref<12xf32, #tpu.memory_space<smem>>
    %600 = vector.broadcast %599 : f32 to vector<2x256xf32>
    %601 = arith.mulf %600, %547 : vector<2x256xf32>
    %602 = arith.addf %598, %601 : vector<2x256xf32>
    %c239_i32_163 = arith.constant 239 : i32
    %603 = tpu.dynamic_rotate %602 by %c239_i32_163 dim 1 : vector<2x256xf32>, i32 -> vector<2x256xf32>
    %cst_164 = arith.constant 0.000000e+00 : f32
    %604 = vector.broadcast %cst_164 : f32 to vector<2x256xf32>
    %605 = arith.select %139, %603, %604 : vector<2x256xi1>, vector<2x256xf32>
    %606 = arith.addf %591, %605 : vector<2x256xf32>
    %c0_165 = arith.constant 0 : index
    %c0_166 = arith.constant 0 : index
    %607 = vector.load %arg13[%c0_165, %c0_166] : memref<2x256xf32, #tpu.memory_space<vmem>>, vector<2x256xf32>
    tpu.vector_store %arg13[%c0_165, %c0_166], %606 {strides = array<i32>} : memref<2x256xf32, #tpu.memory_space<vmem>>, vector<2x256xf32>,
    return
  }
}

</mosaic_0001>

<llo_original>
// kernel: custom_model_fused.1
$region0: #{custom_model_fused.1}
  #allocation0 [shape = 'u32[]', space=smem, size = 0x4, offset = 0x4, fixed_abs, tag = 'smem constant byte address 0x4 - core index']
  #allocation1 [shape = 'u32[144,128]{1,0:T(1,128)}', space=vmem, size = 0x12000, scoped, tag = 'internal scratch']
  #allocation2 [shape = 'f32[1]{0:T(128)S(6)}', space=smem, size = 0x200, scoped, tag = 'scoped memory for custom_model_fused.1']
  #allocation3 [shape = 'f32[1]{0:T(128)S(6)}', space=smem, size = 0x200, scoped, tag = 'scoped memory for custom_model_fused.1']
  #allocation4 [shape = 'f32[1]{0:T(128)S(6)}', space=smem, size = 0x200, scoped, tag = 'scoped memory for custom_model_fused.1']
  %s0 = inlined_call_operand.vmem [shape: f32[2,256], index: 0, kind: input, shape index: {}]
  %s1 = inlined_call_operand.vmem [shape: f32[27], index: 1, kind: input, shape index: {}]
  %s2 = inlined_call_operand.vmem [shape: f32[3], index: 2, kind: input, shape index: {}]
  %s3 = inlined_call_operand.vmem [shape: f32[12], index: 3, kind: input, shape index: {}]
  %s4 = inlined_call_operand.<no memory space> [shape: f32[1], index: 4, kind: input, shape index: {}]
  %s5 = inlined_call_operand.vmem [shape: f32[27], index: 5, kind: input, shape index: {}]
  %s6 = inlined_call_operand.vmem [shape: f32[3], index: 6, kind: input, shape index: {}]
  %s7 = inlined_call_operand.vmem [shape: f32[12], index: 7, kind: input, shape index: {}]
  %s8 = inlined_call_operand.<no memory space> [shape: f32[1], index: 8, kind: input, shape index: {}]
  %s9 = inlined_call_operand.vmem [shape: f32[27], index: 9, kind: input, shape index: {}]
  %s10 = inlined_call_operand.vmem [shape: f32[3], index: 10, kind: input, shape index: {}]
  %s11 = inlined_call_operand.vmem [shape: f32[12], index: 11, kind: input, shape index: {}]
  %s12 = inlined_call_operand.<no memory space> [shape: f32[1], index: 12, kind: input, shape index: {}]
  %s13 = inlined_call_operand.vmem [shape: f32[2,256], index: 13, kind: output, shape index: {}]
  %s14 = sld [smem:[#allocation0]]
  $region98: #{custom_model_fused.1} parent=0
    _
  %s16 = ssub.s32 1, %s14
  %s17 = scalar_select 0, %s16, %s14
  %18 = sst [smem:[#allocation2]] %s4
  %19 = sst [smem:[#allocation3]] %s8
  %20 = sst [smem:[#allocation4]] %s12
  $region1: #{custom_model_fused.1} parent=0
    #allocation5 [shape = 'u8[512]{0}', space=smem, size = 0x200, scoped, tag = 'input window, operand 1, single buffered']
    #allocation6 [shape = 's32[1]{0}', space=sflag, size = 0x4, scoped, tag = 'scoped memory for custom_model_fused.1']
    #allocation7 [shape = 'u8[512]{0}', space=smem, size = 0x200, scoped, tag = 'input window, operand 2, single buffered']
    #allocation8 [shape = 's32[1]{0}', space=sflag, size = 0x4, scoped, tag = 'scoped memory for custom_model_fused.1']
    #allocation9 [shape = 'u8[512]{0}', space=smem, size = 0x200, scoped, tag = 'input window, operand 3, single buffered']
    #allocation10 [shape = 'u8[512]{0}', space=smem, size = 0x200, scoped, tag = 'input window, operand 5, single buffered']
    #allocation11 [shape = 's32[1]{0}', space=sflag, size = 0x4, scoped, tag = 'scoped memory for custom_model_fused.1']
    #allocation12 [shape = 'u8[512]{0}', space=smem, size = 0x200, scoped, tag = 'input window, operand 6, single buffered']
    #allocation13 [shape = 'u8[512]{0}', space=smem, size = 0x200, scoped, tag = 'input window, operand 7, single buffered']
    #allocation14 [shape = 's32[1]{0}', space=sflag, size = 0x4, scoped, tag = 'scoped memory for custom_model_fused.1']
    #allocation15 [shape = 'u8[512]{0}', space=smem, size = 0x200, scoped, tag = 'input window, operand 9, single buffered']
    #allocation16 [shape = 'u8[512]{0}', space=smem, size = 0x200, scoped, tag = 'input window, operand 10, single buffered']
    #allocation17 [shape = 's32[1]{0}', space=sflag, size = 0x4, scoped, tag = 'scoped memory for custom_model_fused.1']
    #allocation18 [shape = 'u8[512]{0}', space=smem, size = 0x200, scoped, tag = 'input window, operand 11, single buffered']
    %21 = vsyncpa [#allocation6], 0
    %22 = vsyncpa [#allocation8], 0
    %23 = vsyncpa [#allocation11], 0
    %24 = vsyncpa [#allocation14], 0
    %25 = vsyncpa [#allocation17], 0
    // Predicated region
    $region2: #{custom_model_fused.1} parent=1 // pred_check
      _
    $region3: #{custom_model_fused.1} parent=1 // pred_check_branch
      %27 = sbr.rel (0) target = $region5
    $region4: #{custom_model_fused.1} parent=1 // pred_region
      _
    $region5: #{custom_model_fused.1} parent=1 // pred_fallthru
      _
    // Predicated region
    $region6: #{custom_model_fused.1} parent=1 // pred_check
      _
    $region7: #{custom_model_fused.1} parent=1 // pred_check_branch
      %29 = sbr.rel (0) target = $region9
    $region8: #{custom_model_fused.1} parent=1 // pred_region
      %s31 = ssub.s32 16, 16
      %32 = vsyncadd [#allocation6], %s31
      %s34 = sshll.u32 %s1, 4
      %s35 = int_to_ptr.vmem [resolvable:$true] %s34
      %37 = dma.vmem_to_smem %s35, 16, [#allocation5], [#allocation6]
    $region9: #{custom_model_fused.1} parent=1 // pred_fallthru
      _
    // Predicated region
    $region10: #{custom_model_fused.1} parent=1 // pred_check
      _
    $region11: #{custom_model_fused.1} parent=1 // pred_check_branch
      %39 = sbr.rel (0) target = $region13
    $region12: #{custom_model_fused.1} parent=1 // pred_region
      %s41 = ssub.s32 16, 16
      %42 = vsyncadd [#allocation8], %s41
      %s44 = sshll.u32 %s2, 4
      %s45 = int_to_ptr.vmem [resolvable:$true] %s44
      %47 = dma.vmem_to_smem %s45, 16, [#allocation7], [#allocation8]
    $region13: #{custom_model_fused.1} parent=1 // pred_fallthru
      _
    // Predicated region
    $region14: #{custom_model_fused.1} parent=1 // pred_check
      _
    $region15: #{custom_model_fused.1} parent=1 // pred_check_branch
      %49 = sbr.rel (0) target = $region17
    $region16: #{custom_model_fused.1} parent=1 // pred_region
      %s51 = ssub.s32 16, 16
      %52 = vsyncadd [#allocation8], %s51
      %s54 = sshll.u32 %s3, 4
      %s55 = int_to_ptr.vmem [resolvable:$true] %s54
      %57 = dma.vmem_to_smem %s55, 16, [#allocation9], [#allocation8]
    $region17: #{custom_model_fused.1} parent=1 // pred_fallthru
      _
    // Predicated region
    $region18: #{custom_model_fused.1} parent=1 // pred_check
      _
    $region19: #{custom_model_fused.1} parent=1 // pred_check_branch
      %59 = sbr.rel (0) target = $region21
    $region20: #{custom_model_fused.1} parent=1 // pred_region
      _
    $region21: #{custom_model_fused.1} parent=1 // pred_fallthru
      _
    // Predicated region
    $region22: #{custom_model_fused.1} parent=1 // pred_check
      _
    $region23: #{custom_model_fused.1} parent=1 // pred_check_branch
      %61 = sbr.rel (0) target = $region25
    $region24: #{custom_model_fused.1} parent=1 // pred_region
      %s63 = ssub.s32 16, 16
      %64 = vsyncadd [#allocation11], %s63
      %s66 = sshll.u32 %s5, 4
      %s67 = int_to_ptr.vmem [resolvable:$true] %s66
      %69 = dma.vmem_to_smem %s67, 16, [#allocation10], [#allocation11]
    $region25: #{custom_model_fused.1} parent=1 // pred_fallthru
      _
    // Predicated region
    $region26: #{custom_model_fused.1} parent=1 // pred_check
      _
    $region27: #{custom_model_fused.1} parent=1 // pred_check_branch
      %71 = sbr.rel (0) target = $region29
    $region28: #{custom_model_fused.1} parent=1 // pred_region
      %s73 = ssub.s32 16, 16
      %74 = vsyncadd [#allocation11], %s73
      %s76 = sshll.u32 %s6, 4
      %s77 = int_to_ptr.vmem [resolvable:$true] %s76
      %79 = dma.vmem_to_smem %s77, 16, [#allocation12], [#allocation11]
    $region29: #{custom_model_fused.1} parent=1 // pred_fallthru
      _
    // Predicated region
    $region30: #{custom_model_fused.1} parent=1 // pred_check
      _
    $region31: #{custom_model_fused.1} parent=1 // pred_check_branch
      %81 = sbr.rel (0) target = $region33
    $region32: #{custom_model_fused.1} parent=1 // pred_region
      %s83 = ssub.s32 16, 16
      %84 = vsyncadd [#allocation14], %s83
      %s86 = sshll.u32 %s7, 4
      %s87 = int_to_ptr.vmem [resolvable:$true] %s86
      %89 = dma.vmem_to_smem %s87, 16, [#allocation13], [#allocation14]
    $region33: #{custom_model_fused.1} parent=1 // pred_fallthru
      _
    // Predicated region
    $region34: #{custom_model_fused.1} parent=1 // pred_check
      _
    $region35: #{custom_model_fused.1} parent=1 // pred_check_branch
      %91 = sbr.rel (0) target = $region37
    $region36: #{custom_model_fused.1} parent=1 // pred_region
      _
    $region37: #{custom_model_fused.1} parent=1 // pred_fallthru
      _
    // Predicated region
    $region38: #{custom_model_fused.1} parent=1 // pred_check
      _
    $region39: #{custom_model_fused.1} parent=1 // pred_check_branch
      %93 = sbr.rel (0) target = $region41
    $region40: #{custom_model_fused.1} parent=1 // pred_region
      %s95 = ssub.s32 16, 16
      %96 = vsyncadd [#allocation14], %s95
      %s98 = sshll.u32 %s9, 4
      %s99 = int_to_ptr.vmem [resolvable:$true] %s98
      %101 = dma.vmem_to_smem %s99, 16, [#allocation15], [#allocation14]
    $region41: #{custom_model_fused.1} parent=1 // pred_fallthru
      _
    // Predicated region
    $region42: #{custom_model_fused.1} parent=1 // pred_check
      _
    $region43: #{custom_model_fused.1} parent=1 // pred_check_branch
      %103 = sbr.rel (0) target = $region45
    $region44: #{custom_model_fused.1} parent=1 // pred_region
      %s105 = ssub.s32 16, 16
      %106 = vsyncadd [#allocation17], %s105
      %s108 = sshll.u32 %s10, 4
      %s109 = int_to_ptr.vmem [resolvable:$true] %s108
      %111 = dma.vmem_to_smem %s109, 16, [#allocation16], [#allocation17]
    $region45: #{custom_model_fused.1} parent=1 // pred_fallthru
      _
    // Predicated region
    $region46: #{custom_model_fused.1} parent=1 // pred_check
      _
    $region47: #{custom_model_fused.1} parent=1 // pred_check_branch
      %113 = sbr.rel (0) target = $region49
    $region48: #{custom_model_fused.1} parent=1 // pred_region
      %s115 = ssub.s32 16, 16
      %116 = vsyncadd [#allocation17], %s115
      %s118 = sshll.u32 %s11, 4
      %s119 = int_to_ptr.vmem [resolvable:$true] %s118
      %121 = dma.vmem_to_smem %s119, 16, [#allocation18], [#allocation17]
    $region49: #{custom_model_fused.1} parent=1 // pred_fallthru
      _
    // Predicated region
    $region50: #{custom_model_fused.1} parent=1 // pred_check
      _
    $region51: #{custom_model_fused.1} parent=1 // pred_check_branch
      %123 = sbr.rel (0) target = $region53
    $region52: #{custom_model_fused.1} parent=1 // pred_region
      _
    $region53: #{custom_model_fused.1} parent=1 // pred_fallthru
      _
    // Predicated region
    $region54: #{custom_model_fused.1} parent=1 // pred_check
      _
    $region55: #{custom_model_fused.1} parent=1 // pred_check_branch
      %125 = sbr.rel (0) target = $region57
    $region56: #{custom_model_fused.1} parent=1 // pred_region
      %126 = dma.done [#allocation6], 16
    $region57: #{custom_model_fused.1} parent=1 // pred_fallthru
      _
    // Predicated region
    $region58: #{custom_model_fused.1} parent=1 // pred_check
      _
    $region59: #{custom_model_fused.1} parent=1 // pred_check_branch
      %128 = sbr.rel (0) target = $region61
    $region60: #{custom_model_fused.1} parent=1 // pred_region
      %129 = dma.done [#allocation8], 16
    $region61: #{custom_model_fused.1} parent=1 // pred_fallthru
      _
    // Predicated region
    $region62: #{custom_model_fused.1} parent=1 // pred_check
      _
    $region63: #{custom_model_fused.1} parent=1 // pred_check_branch
      %131 = sbr.rel (0) target = $region65
    $region64: #{custom_model_fused.1} parent=1 // pred_region
      %132 = dma.done [#allocation8], 16
    $region65: #{custom_model_fused.1} parent=1 // pred_fallthru
      _
    // Predicated region
    $region66: #{custom_model_fused.1} parent=1 // pred_check
      _
    $region67: #{custom_model_fused.1} parent=1 // pred_check_branch
      %134 = sbr.rel (0) target = $region69
    $region68: #{custom_model_fused.1} parent=1 // pred_region
      %135 = dma.done [#allocation11], 16
    $region69: #{custom_model_fused.1} parent=1 // pred_fallthru
      _
    // Predicated region
    $region70: #{custom_model_fused.1} parent=1 // pred_check
      _
    $region71: #{custom_model_fused.1} parent=1 // pred_check_branch
      %137 = sbr.rel (0) target = $region73
    $region72: #{custom_model_fused.1} parent=1 // pred_region
      %138 = dma.done [#allocation11], 16
    $region73: #{custom_model_fused.1} parent=1 // pred_fallthru
      _
    // Predicated region
    $region74: #{custom_model_fused.1} parent=1 // pred_check
      _
    $region75: #{custom_model_fused.1} parent=1 // pred_check_branch
      %140 = sbr.rel (0) target = $region77
    $region76: #{custom_model_fused.1} parent=1 // pred_region
      %141 = dma.done [#allocation14], 16
    $region77: #{custom_model_fused.1} parent=1 // pred_fallthru
      _
    // Predicated region
    $region78: #{custom_model_fused.1} parent=1 // pred_check
      _
    $region79: #{custom_model_fused.1} parent=1 // pred_check_branch
      %143 = sbr.rel (0) target = $region81
    $region80: #{custom_model_fused.1} parent=1 // pred_region
      %144 = dma.done [#allocation14], 16
    $region81: #{custom_model_fused.1} parent=1 // pred_fallthru
      _
    // Predicated region
    $region82: #{custom_model_fused.1} parent=1 // pred_check
      _
    $region83: #{custom_model_fused.1} parent=1 // pred_check_branch
      %146 = sbr.rel (0) target = $region85
    $region84: #{custom_model_fused.1} parent=1 // pred_region
      %147 = dma.done [#allocation17], 16
    $region85: #{custom_model_fused.1} parent=1 // pred_fallthru
      _
    // Predicated region
    $region86: #{custom_model_fused.1} parent=1 // pred_check
      _
    $region87: #{custom_model_fused.1} parent=1 // pred_check_branch
      %149 = sbr.rel (0) target = $region89
    $region88: #{custom_model_fused.1} parent=1 // pred_region
      %150 = dma.done [#allocation17], 16
    $region89: #{custom_model_fused.1} parent=1 // pred_fallthru
      _
    %151 = sfence
    %v152 = vlaneseq
    %v153 = vand.u32 %v152, 127
    %v154 = vadd.s32 %v153, 128
    %v155 = vand.u32 %v153, 15
    %v156 = vand.u32 %v154, 15
    %vm157 = vcmp.ge.s32.totalorder %v153, 16
    %vm158 = vcmp.ge.s32.totalorder %v154, 16
    %vm159 = vcmp.lt.s32.totalorder %v153, 240
    %vm160 = vcmp.lt.s32.totalorder %v154, 240
    %vm161 = vcmp.ge.s32.totalorder %v155, 1
    %vm162 = vcmp.ge.s32.totalorder %v156, 1
    %vm163 = vcmp.le.s32.totalorder %v155, 14
    %vm164 = vcmp.le.s32.totalorder %v156, 14
    %v165 = vld [vmem:[%s0] sm:$0xf]
    %v168 = vunpack.c.l.s4 1983009808
    %v169 = vunpack.c.0.s8 %v168
    %v170 = vlaneseq
    %v171 = vshrl.u32 %v170, 7
    %v172 = vsub.s32 %v169, %v171
    %v173 = vrot.slane %v165, %v172
    %v174 = vcombine.high %v173, %v173
    %177 = vrot.lane.b32.xlu0 %v173, 17
    %v178 = vpop.permute.xlu0 %177
    %179 = vrot.lane.b32.xlu0 %v174, 17
    %v180 = vpop.permute.xlu0 %179
    %vm181 = vcmp.lt.s32.totalorder %v153, 17
    %v182 = vsel %vm181, %v178, %v180
    %v183 = vsel %vm181, %v180, %v178
    %vm184 = vmand %vm157, %vm161
    %vm185 = vmand %vm158, %vm162
    %v186 = vsel %vm184, %v183, 0.0
    %v187 = vsel %vm185, %v182, 0.0
    %s188 = sld [smem:[#allocation5]]
    %v189 = vstv %s188
    %v190 = vmul.f32 %v189, %v186
    %v191 = vmul.f32 %v189, %v187
    %s192 = sld [smem:[#allocation7]]
    %v193 = vstv %s192
    %v194 = vadd.f32 %v190, %v193
    %v195 = vadd.f32 %v191, %v193
    %s196 = sld [smem:[#allocation5 + $0x9]]
    %v197 = vstv %s196
    %v198 = vmul.f32 %v197, %v186
    %v199 = vmul.f32 %v197, %v187
    %s200 = sld [smem:[#allocation7 + $0x1]]
    %v201 = vstv %s200
    %v202 = vadd.f32 %v198, %v201
    %v203 = vadd.f32 %v199, %v201
    %s204 = sld [smem:[#allocation5 + $0x12]]
    %v205 = vstv %s204
    %v206 = vmul.f32 %v205, %v186
    %v207 = vmul.f32 %v205, %v187
    %s208 = sld [smem:[#allocation7 + $0x2]]
    %v209 = vstv %s208
    %v210 = vadd.f32 %v206, %v209
    %v211 = vadd.f32 %v207, %v209
    %212 = vrot.lane.b32.xlu0 %v173, 16
    %v213 = vpop.permute.xlu0 %212
    %214 = vrot.lane.b32.xlu0 %v174, 16
    %v215 = vpop.permute.xlu0 %214
    %vm216 = vcmp.lt.s32.totalorder %v153, 16
    %v217 = vsel %vm216, %v213, %v215
    %v218 = vsel %vm216, %v215, %v213
    %v219 = vsel %vm157, %v218, 0.0
    %v220 = vsel %vm158, %v217, 0.0
    %s221 = sld [smem:[#allocation5 + $0x1]]
    %v222 = vstv %s221
    %v223 = vmul.f32 %v222, %v219
    %v224 = vmul.f32 %v222, %v220
    %v225 = vadd.f32 %v194, %v223
    %v226 = vadd.f32 %v195, %v224
    %s227 = sld [smem:[#allocation5 + $0xa]]
    %v228 = vstv %s227
    %v229 = vmul.f32 %v228, %v219
    %v230 = vmul.f32 %v228, %v220
    %v231 = vadd.f32 %v202, %v229
    %v232 = vadd.f32 %v203, %v230
    %s233 = sld [smem:[#allocation5 + $0x13]]
    %v234 = vstv %s233
    %v235 = vmul.f32 %v234, %v219
    %v236 = vmul.f32 %v234, %v220
    %v237 = vadd.f32 %v210, %v235
    %v238 = vadd.f32 %v211, %v236
    %239 = vrot.lane.b32.xlu0 %v173, 15
    %v240 = vpop.permute.xlu0 %239
    %241 = vrot.lane.b32.xlu0 %v174, 15
    %v242 = vpop.permute.xlu0 %241
    %vm243 = vcmp.lt.s32.totalorder %v153, 15
    %v244 = vsel %vm243, %v240, %v242
    %v245 = vsel %vm243, %v242, %v240
    %vm246 = vmand %vm157, %vm163
    %vm247 = vmand %vm158, %vm164
    %v248 = vsel %vm246, %v245, 0.0
    %v249 = vsel %vm247, %v244, 0.0
    %s250 = sld [smem:[#allocation5 + $0x2]]
    %v251 = vstv %s250
    %v252 = vmul.f32 %v251, %v248
    %v253 = vmul.f32 %v251, %v249
    %v254 = vadd.f32 %v225, %v252
    %v255 = vadd.f32 %v226, %v253
    %s256 = sld [smem:[#allocation5 + $0xb]]
    %v257 = vstv %s256
    %v258 = vmul.f32 %v257, %v248
    %v259 = vmul.f32 %v257, %v249
    %v260 = vadd.f32 %v231, %v258
    %v261 = vadd.f32 %v232, %v259
    %s262 = sld [smem:[#allocation5 + $0x14]]
    %v263 = vstv %s262
    %v264 = vmul.f32 %v263, %v248
    %v265 = vmul.f32 %v263, %v249
    %v266 = vadd.f32 %v237, %v264
    %v267 = vadd.f32 %v238, %v265
    %268 = vrot.lane.b32.xlu0 %v173, 1
    %v269 = vpop.permute.xlu0 %268
    %270 = vrot.lane.b32.xlu0 %v174, 1
    %v271 = vpop.permute.xlu0 %270
    %vm272 = vcmp.lt.s32.totalorder %v153, 1
    %v273 = vsel %vm272, %v269, %v271
    %v274 = vsel %vm272, %v271, %v269
    %v275 = vsel %vm161, %v274, 0.0
    %v276 = vsel %vm162, %v273, 0.0
    %s277 = sld [smem:[#allocation5 + $0x3]]
    %v278 = vstv %s277
    %v279 = vmul.f32 %v278, %v275
    %v280 = vmul.f32 %v278, %v276
    %v281 = vadd.f32 %v254, %v279
    %v282 = vadd.f32 %v255, %v280
    %s283 = sld [smem:[#allocation5 + $0xc]]
    %v284 = vstv %s283
    %v285 = vmul.f32 %v284, %v275
    %v286 = vmul.f32 %v284, %v276
    %v287 = vadd.f32 %v260, %v285
    %v288 = vadd.f32 %v261, %v286
    %s289 = sld [smem:[#allocation5 + $0x15]]
    %v290 = vstv %s289
    %v291 = vmul.f32 %v290, %v275
    %v292 = vmul.f32 %v290, %v276
    %v293 = vadd.f32 %v266, %v291
    %v294 = vadd.f32 %v267, %v292
    %s295 = sld [smem:[#allocation5 + $0x4]]
    %v296 = vstv %s295
    %v297 = vmul.f32 %v296, %v165
    %v300 = vunpack.c.l.s4 1983009808
    %v301 = vunpack.c.0.s8 %v300
    %v302 = vlaneseq
    %v303 = vshrl.u32 %v302, 7
    %v304 = vsub.s32 %v301, %v303
    %v305 = vrot.slane %v297, %v304
    %v306 = vcombine.high %v305, %v305
    %v309 = vadd.f32 %v281, %v305
    %v310 = vadd.f32 %v282, %v306
    %s311 = sld [smem:[#allocation5 + $0xd]]
    %v312 = vstv %s311
    %v313 = vmul.f32 %v312, %v165
    %v316 = vunpack.c.l.s4 1983009808
    %v317 = vunpack.c.0.s8 %v316
    %v318 = vlaneseq
    %v319 = vshrl.u32 %v318, 7
    %v320 = vsub.s32 %v317, %v319
    %v321 = vrot.slane %v313, %v320
    %v322 = vcombine.high %v321, %v321
    %v325 = vadd.f32 %v287, %v321
    %v326 = vadd.f32 %v288, %v322
    %s327 = sld [smem:[#allocation5 + $0x16]]
    %v328 = vstv %s327
    %v329 = vmul.f32 %v328, %v165
    %v332 = vunpack.c.l.s4 1983009808
    %v333 = vunpack.c.0.s8 %v332
    %v334 = vlaneseq
    %v335 = vshrl.u32 %v334, 7
    %v336 = vsub.s32 %v333, %v335
    %v337 = vrot.slane %v329, %v336
    %v338 = vcombine.high %v337, %v337
    %v341 = vadd.f32 %v293, %v337
    %v342 = vadd.f32 %v294, %v338
    %343 = vrot.lane.b32.xlu0 %v173, 127
    %v344 = vpop.permute.xlu0 %343
    %345 = vrot.lane.b32.xlu0 %v174, 127
    %v346 = vpop.permute.xlu0 %345
    %vm347 = vcmp.lt.s32.totalorder %v153, 127
    %v348 = vsel %vm347, %v344, %v346
    %v349 = vsel %vm347, %v346, %v344
    %v350 = vsel %vm163, %v348, 0.0
    %v351 = vsel %vm164, %v349, 0.0
    %s352 = sld [smem:[#allocation5 + $0x5]]
    %v353 = vstv %s352
    %v354 = vmul.f32 %v353, %v350
    %v355 = vmul.f32 %v353, %v351
    %v356 = vadd.f32 %v309, %v354
    %v357 = vadd.f32 %v310, %v355
    %s358 = sld [smem:[#allocation5 + $0xe]]
    %v359 = vstv %s358
    %v360 = vmul.f32 %v359, %v350
    %v361 = vmul.f32 %v359, %v351
    %v362 = vadd.f32 %v325, %v360
    %v363 = vadd.f32 %v326, %v361
    %s364 = sld [smem:[#allocation5 + $0x17]]
    %v365 = vstv %s364
    %v366 = vmul.f32 %v365, %v350
    %v367 = vmul.f32 %v365, %v351
    %v368 = vadd.f32 %v341, %v366
    %v369 = vadd.f32 %v342, %v367
    %370 = vrot.lane.b32.xlu0 %v173, 113
    %v371 = vpop.permute.xlu0 %370
    %372 = vrot.lane.b32.xlu0 %v174, 113
    %v373 = vpop.permute.xlu0 %372
    %vm374 = vcmp.lt.s32.totalorder %v153, 113
    %v375 = vsel %vm374, %v371, %v373
    %v376 = vsel %vm374, %v373, %v371
    %vm377 = vmand %vm159, %vm161
    %vm378 = vmand %vm160, %vm162
    %v379 = vsel %vm377, %v375, 0.0
    %v380 = vsel %vm378, %v376, 0.0
    %s381 = sld [smem:[#allocation5 + $0x6]]
    %v382 = vstv %s381
    %v383 = vmul.f32 %v382, %v379
    %v384 = vmul.f32 %v382, %v380
    %v385 = vadd.f32 %v356, %v383
    %v386 = vadd.f32 %v357, %v384
    %s387 = sld [smem:[#allocation5 + $0xf]]
    %v388 = vstv %s387
    %v389 = vmul.f32 %v388, %v379
    %v390 = vmul.f32 %v388, %v380
    %v391 = vadd.f32 %v362, %v389
    %v392 = vadd.f32 %v363, %v390
    %s393 = sld [smem:[#allocation5 + $0x18]]
    %v394 = vstv %s393
    %v395 = vmul.f32 %v394, %v379
    %v396 = vmul.f32 %v394, %v380
    %v397 = vadd.f32 %v368, %v395
    %v398 = vadd.f32 %v369, %v396
    %399 = vrot.lane.b32.xlu0 %v173, 112
    %v400 = vpop.permute.xlu0 %399
    %401 = vrot.lane.b32.xlu0 %v174, 112
    %v402 = vpop.permute.xlu0 %401
    %vm403 = vcmp.lt.s32.totalorder %v153, 112
    %v404 = vsel %vm403, %v400, %v402
    %v405 = vsel %vm403, %v402, %v400
    %v406 = vsel %vm159, %v404, 0.0
    %v407 = vsel %vm160, %v405, 0.0
    %s408 = sld [smem:[#allocation5 + $0x7]]
    %v409 = vstv %s408
    %v410 = vmul.f32 %v409, %v406
    %v411 = vmul.f32 %v409, %v407
    %v412 = vadd.f32 %v385, %v410
    %v413 = vadd.f32 %v386, %v411
    %s414 = sld [smem:[#allocation5 + $0x10]]
    %v415 = vstv %s414
    %v416 = vmul.f32 %v415, %v406
    %v417 = vmul.f32 %v415, %v407
    %v418 = vadd.f32 %v391, %v416
    %v419 = vadd.f32 %v392, %v417
    %s420 = sld [smem:[#allocation5 + $0x19]]
    %v421 = vstv %s420
    %v422 = vmul.f32 %v421, %v406
    %v423 = vmul.f32 %v421, %v407
    %v424 = vadd.f32 %v397, %v422
    %v425 = vadd.f32 %v398, %v423
    %426 = vrot.lane.b32.xlu0 %v173, 111
    %v427 = vpop.permute.xlu0 %426
    %428 = vrot.lane.b32.xlu0 %v174, 111
    %v429 = vpop.permute.xlu0 %428
    %vm430 = vcmp.lt.s32.totalorder %v153, 111
    %v431 = vsel %vm430, %v427, %v429
    %v432 = vsel %vm430, %v429, %v427
    %vm433 = vmand %vm159, %vm163
    %vm434 = vmand %vm160, %vm164
    %v435 = vsel %vm433, %v431, 0.0
    %v436 = vsel %vm434, %v432, 0.0
    %s437 = sld [smem:[#allocation5 + $0x8]]
    %v438 = vstv %s437
    %v439 = vmul.f32 %v438, %v435
    %v440 = vmul.f32 %v438, %v436
    %v441 = vadd.f32 %v412, %v439
    %v442 = vadd.f32 %v413, %v440
    %s443 = sld [smem:[#allocation5 + $0x11]]
    %v444 = vstv %s443
    %v445 = vmul.f32 %v444, %v435
    %v446 = vmul.f32 %v444, %v436
    %v447 = vadd.f32 %v418, %v445
    %v448 = vadd.f32 %v419, %v446
    %s449 = sld [smem:[#allocation5 + $0x1a]]
    %v450 = vstv %s449
    %v451 = vmul.f32 %v450, %v435
    %v452 = vmul.f32 %v450, %v436
    %v453 = vadd.f32 %v424, %v451
    %v454 = vadd.f32 %v425, %v452
    %s455 = sld [smem:[#allocation9]]
    %v456 = vstv %s455
    %v457 = vmul.f32 %v456, %v441
    %v458 = vmul.f32 %v456, %v442
    %s459 = sld [smem:[#allocation9 + $0x4]]
    %v460 = vstv %s459
    %v461 = vmul.f32 %v460, %v447
    %v462 = vmul.f32 %v460, %v448
    %v463 = vadd.f32 %v457, %v461
    %v464 = vadd.f32 %v458, %v462
    %s465 = sld [smem:[#allocation9 + $0x8]]
    %v466 = vstv %s465
    %v467 = vmul.f32 %v466, %v453
    %v468 = vmul.f32 %v466, %v454
    %v469 = vadd.f32 %v463, %v467
    %v470 = vadd.f32 %v464, %v468
    %s471 = sld [smem:[#allocation2]]
    %v472 = vstv %s471
    %v473 = vadd.f32 %v469, %v472
    %v474 = vadd.f32 %v470, %v472
    %s475 = sld [smem:[#allocation9 + $0x1]]
    %v476 = vstv %s475
    %v477 = vmul.f32 %v476, %v441
    %v478 = vmul.f32 %v476, %v442
    %s479 = sld [smem:[#allocation9 + $0x5]]
    %v480 = vstv %s479
    %v481 = vmul.f32 %v480, %v447
    %v482 = vmul.f32 %v480, %v448
    %v483 = vadd.f32 %v477, %v481
    %v484 = vadd.f32 %v478, %v482
    %s485 = sld [smem:[#allocation9 + $0x9]]
    %v486 = vstv %s485
    %v487 = vmul.f32 %v486, %v453
    %v488 = vmul.f32 %v486, %v454
    %v489 = vadd.f32 %v483, %v487
    %v490 = vadd.f32 %v484, %v488
    %491 = vrot.lane.b32.xlu0 %v489, 127
    %v492 = vpop.permute.xlu0 %491
    %493 = vrot.lane.b32.xlu0 %v490, 127
    %v494 = vpop.permute.xlu0 %493
    %v495 = vsel %vm347, %v492, %v494
    %v496 = vsel %vm347, %v494, %v492
    %v497 = vsel %vm163, %v495, 0.0
    %v498 = vsel %vm164, %v496, 0.0
    %v499 = vadd.f32 %v473, %v497
    %v500 = vadd.f32 %v474, %v498
    %s501 = sld [smem:[#allocation9 + $0x2]]
    %v502 = vstv %s501
    %v503 = vmul.f32 %v502, %v441
    %v504 = vmul.f32 %v502, %v442
    %s505 = sld [smem:[#allocation9 + $0x6]]
    %v506 = vstv %s505
    %v507 = vmul.f32 %v506, %v447
    %v508 = vmul.f32 %v506, %v448
    %v509 = vadd.f32 %v503, %v507
    %v510 = vadd.f32 %v504, %v508
    %s511 = sld [smem:[#allocation9 + $0xa]]
    %v512 = vstv %s511
    %v513 = vmul.f32 %v512, %v453
    %v514 = vmul.f32 %v512, %v454
    %v515 = vadd.f32 %v509, %v513
    %v516 = vadd.f32 %v510, %v514
    %517 = vrot.lane.b32.xlu0 %v515, 112
    %v518 = vpop.permute.xlu0 %517
    %519 = vrot.lane.b32.xlu0 %v516, 112
    %v520 = vpop.permute.xlu0 %519
    %v521 = vsel %vm403, %v518, %v520
    %v522 = vsel %vm403, %v520, %v518
    %v523 = vsel %vm159, %v521, 0.0
    %v524 = vsel %vm160, %v522, 0.0
    %v525 = vadd.f32 %v499, %v523
    %v526 = vadd.f32 %v500, %v524
    %s527 = sld [smem:[#allocation9 + $0x3]]
    %v528 = vstv %s527
    %v529 = vmul.f32 %v528, %v441
    %v530 = vmul.f32 %v528, %v442
    %s531 = sld [smem:[#allocation9 + $0x7]]
    %v532 = vstv %s531
    %v533 = vmul.f32 %v532, %v447
    %v534 = vmul.f32 %v532, %v448
    %v535 = vadd.f32 %v529, %v533
    %v536 = vadd.f32 %v530, %v534
    %s537 = sld [smem:[#allocation9 + $0xb]]
    %v538 = vstv %s537
    %v539 = vmul.f32 %v538, %v453
    %v540 = vmul.f32 %v538, %v454
    %v541 = vadd.f32 %v535, %v539
    %v542 = vadd.f32 %v536, %v540
    %543 = vrot.lane.b32.xlu0 %v541, 111
    %v544 = vpop.permute.xlu0 %543
    %545 = vrot.lane.b32.xlu0 %v542, 111
    %v546 = vpop.permute.xlu0 %545
    %v547 = vsel %vm430, %v544, %v546
    %v548 = vsel %vm430, %v546, %v544
    %v549 = vsel %vm433, %v547, 0.0
    %v550 = vsel %vm434, %v548, 0.0
    %v551 = vadd.f32 %v525, %v549
    %v552 = vadd.f32 %v526, %v550
    %553 = vrot.lane.b32.xlu0 %v551, 17
    %v554 = vpop.permute.xlu0 %553
    %555 = vrot.lane.b32.xlu0 %v552, 17
    %v556 = vpop.permute.xlu0 %555
    %v557 = vsel %vm181, %v554, %v556
    %v558 = vsel %vm181, %v556, %v554
    %v559 = vsel %vm184, %v558, 0.0
    %v560 = vsel %vm185, %v557, 0.0
    %s561 = sld [smem:[#allocation10]]
    %v562 = vstv %s561
    %v563 = vmul.f32 %v562, %v559
    %v564 = vmul.f32 %v562, %v560
    %s565 = sld [smem:[#allocation12]]
    %v566 = vstv %s565
    %v567 = vadd.f32 %v563, %v566
    %v568 = vadd.f32 %v564, %v566
    %s569 = sld [smem:[#allocation10 + $0x9]]
    %v570 = vstv %s569
    %v571 = vmul.f32 %v570, %v559
    %v572 = vmul.f32 %v570, %v560
    %s573 = sld [smem:[#allocation12 + $0x1]]
    %v574 = vstv %s573
    %v575 = vadd.f32 %v571, %v574
    %v576 = vadd.f32 %v572, %v574
    %s577 = sld [smem:[#allocation10 + $0x12]]
    %v578 = vstv %s577
    %v579 = vmul.f32 %v578, %v559
    %v580 = vmul.f32 %v578, %v560
    %s581 = sld [smem:[#allocation12 + $0x2]]
    %v582 = vstv %s581
    %v583 = vadd.f32 %v579, %v582
    %v584 = vadd.f32 %v580, %v582
    %585 = vrot.lane.b32.xlu0 %v551, 16
    %v586 = vpop.permute.xlu0 %585
    %587 = vrot.lane.b32.xlu0 %v552, 16
    %v588 = vpop.permute.xlu0 %587
    %v589 = vsel %vm216, %v586, %v588
    %v590 = vsel %vm216, %v588, %v586
    %v591 = vsel %vm157, %v590, 0.0
    %v592 = vsel %vm158, %v589, 0.0
    %s593 = sld [smem:[#allocation10 + $0x1]]
    %v594 = vstv %s593
    %v595 = vmul.f32 %v594, %v591
    %v596 = vmul.f32 %v594, %v592
    %v597 = vadd.f32 %v567, %v595
    %v598 = vadd.f32 %v568, %v596
    %s599 = sld [smem:[#allocation10 + $0xa]]
    %v600 = vstv %s599
    %v601 = vmul.f32 %v600, %v591
    %v602 = vmul.f32 %v600, %v592
    %v603 = vadd.f32 %v575, %v601
    %v604 = vadd.f32 %v576, %v602
    %s605 = sld [smem:[#allocation10 + $0x13]]
    %v606 = vstv %s605
    %v607 = vmul.f32 %v606, %v591
    %v608 = vmul.f32 %v606, %v592
    %v609 = vadd.f32 %v583, %v607
    %v610 = vadd.f32 %v584, %v608
    %611 = vrot.lane.b32.xlu0 %v551, 15
    %v612 = vpop.permute.xlu0 %611
    %613 = vrot.lane.b32.xlu0 %v552, 15
    %v614 = vpop.permute.xlu0 %613
    %v615 = vsel %vm243, %v612, %v614
    %v616 = vsel %vm243, %v614, %v612
    %v617 = vsel %vm246, %v616, 0.0
    %v618 = vsel %vm247, %v615, 0.0
    %s619 = sld [smem:[#allocation10 + $0x2]]
    %v620 = vstv %s619
    %v621 = vmul.f32 %v620, %v617
    %v622 = vmul.f32 %v620, %v618
    %v623 = vadd.f32 %v597, %v621
    %v624 = vadd.f32 %v598, %v622
    %s625 = sld [smem:[#allocation10 + $0xb]]
    %v626 = vstv %s625
    %v627 = vmul.f32 %v626, %v617
    %v628 = vmul.f32 %v626, %v618
    %v629 = vadd.f32 %v603, %v627
    %v630 = vadd.f32 %v604, %v628
    %s631 = sld [smem:[#allocation10 + $0x14]]
    %v632 = vstv %s631
    %v633 = vmul.f32 %v632, %v617
    %v634 = vmul.f32 %v632, %v618
    %v635 = vadd.f32 %v609, %v633
    %v636 = vadd.f32 %v610, %v634
    %637 = vrot.lane.b32.xlu0 %v551, 1
    %v638 = vpop.permute.xlu0 %637
    %639 = vrot.lane.b32.xlu0 %v552, 1
    %v640 = vpop.permute.xlu0 %639
    %v641 = vsel %vm272, %v638, %v640
    %v642 = vsel %vm272, %v640, %v638
    %v643 = vsel %vm161, %v642, 0.0
    %v644 = vsel %vm162, %v641, 0.0
    %s645 = sld [smem:[#allocation10 + $0x3]]
    %v646 = vstv %s645
    %v647 = vmul.f32 %v646, %v643
    %v648 = vmul.f32 %v646, %v644
    %v649 = vadd.f32 %v623, %v647
    %v650 = vadd.f32 %v624, %v648
    %s651 = sld [smem:[#allocation10 + $0xc]]
    %v652 = vstv %s651
    %v653 = vmul.f32 %v652, %v643
    %v654 = vmul.f32 %v652, %v644
    %v655 = vadd.f32 %v629, %v653
    %v656 = vadd.f32 %v630, %v654
    %s657 = sld [smem:[#allocation10 + $0x15]]
    %v658 = vstv %s657
    %v659 = vmul.f32 %v658, %v643
    %v660 = vmul.f32 %v658, %v644
    %v661 = vadd.f32 %v635, %v659
    %v662 = vadd.f32 %v636, %v660
    %s663 = sld [smem:[#allocation10 + $0x4]]
    %v664 = vstv %s663
    %v665 = vmul.f32 %v664, %v551
    %v666 = vmul.f32 %v664, %v552
    %v667 = vadd.f32 %v649, %v665
    %v668 = vadd.f32 %v650, %v666
    %s669 = sld [smem:[#allocation10 + $0xd]]
    %v670 = vstv %s669
    %v671 = vmul.f32 %v670, %v551
    %v672 = vmul.f32 %v670, %v552
    %v673 = vadd.f32 %v655, %v671
    %v674 = vadd.f32 %v656, %v672
    %s675 = sld [smem:[#allocation10 + $0x16]]
    %v676 = vstv %s675
    %v677 = vmul.f32 %v676, %v551
    %v678 = vmul.f32 %v676, %v552
    %v679 = vadd.f32 %v661, %v677
    %v680 = vadd.f32 %v662, %v678
    %681 = vrot.lane.b32.xlu0 %v551, 127
    %v682 = vpop.permute.xlu0 %681
    %683 = vrot.lane.b32.xlu0 %v552, 127
    %v684 = vpop.permute.xlu0 %683
    %v685 = vsel %vm347, %v682, %v684
    %v686 = vsel %vm347, %v684, %v682
    %v687 = vsel %vm163, %v685, 0.0
    %v688 = vsel %vm164, %v686, 0.0
    %s689 = sld [smem:[#allocation10 + $0x5]]
    %v690 = vstv %s689
    %v691 = vmul.f32 %v690, %v687
    %v692 = vmul.f32 %v690, %v688
    %v693 = vadd.f32 %v667, %v691
    %v694 = vadd.f32 %v668, %v692
    %s695 = sld [smem:[#allocation10 + $0xe]]
    %v696 = vstv %s695
    %v697 = vmul.f32 %v696, %v687
    %v698 = vmul.f32 %v696, %v688
    %v699 = vadd.f32 %v673, %v697
    %v700 = vadd.f32 %v674, %v698
    %s701 = sld [smem:[#allocation10 + $0x17]]
    %v702 = vstv %s701
    %v703 = vmul.f32 %v702, %v687
    %v704 = vmul.f32 %v702, %v688
    %v705 = vadd.f32 %v679, %v703
    %v706 = vadd.f32 %v680, %v704
    %707 = vrot.lane.b32.xlu0 %v551, 113
    %v708 = vpop.permute.xlu0 %707
    %709 = vrot.lane.b32.xlu0 %v552, 113
    %v710 = vpop.permute.xlu0 %709
    %v711 = vsel %vm374, %v708, %v710
    %v712 = vsel %vm374, %v710, %v708
    %v713 = vsel %vm377, %v711, 0.0
    %v714 = vsel %vm378, %v712, 0.0
    %s715 = sld [smem:[#allocation10 + $0x6]]
    %v716 = vstv %s715
    %v717 = vmul.f32 %v716, %v713
    %v718 = vmul.f32 %v716, %v714
    %v719 = vadd.f32 %v693, %v717
    %v720 = vadd.f32 %v694, %v718
    %s721 = sld [smem:[#allocation10 + $0xf]]
    %v722 = vstv %s721
    %v723 = vmul.f32 %v722, %v713
    %v724 = vmul.f32 %v722, %v714
    %v725 = vadd.f32 %v699, %v723
    %v726 = vadd.f32 %v700, %v724
    %s727 = sld [smem:[#allocation10 + $0x18]]
    %v728 = vstv %s727
    %v729 = vmul.f32 %v728, %v713
    %v730 = vmul.f32 %v728, %v714
    %v731 = vadd.f32 %v705, %v729
    %v732 = vadd.f32 %v706, %v730
    %733 = vrot.lane.b32.xlu0 %v551, 112
    %v734 = vpop.permute.xlu0 %733
    %735 = vrot.lane.b32.xlu0 %v552, 112
    %v736 = vpop.permute.xlu0 %735
    %v737 = vsel %vm403, %v734, %v736
    %v738 = vsel %vm403, %v736, %v734
    %v739 = vsel %vm159, %v737, 0.0
    %v740 = vsel %vm160, %v738, 0.0
    %s741 = sld [smem:[#allocation10 + $0x7]]
    %v742 = vstv %s741
    %v743 = vmul.f32 %v742, %v739
    %v744 = vmul.f32 %v742, %v740
    %v745 = vadd.f32 %v719, %v743
    %v746 = vadd.f32 %v720, %v744
    %s747 = sld [smem:[#allocation10 + $0x10]]
    %v748 = vstv %s747
    %v749 = vmul.f32 %v748, %v739
    %v750 = vmul.f32 %v748, %v740
    %v751 = vadd.f32 %v725, %v749
    %v752 = vadd.f32 %v726, %v750
    %s753 = sld [smem:[#allocation10 + $0x19]]
    %v754 = vstv %s753
    %v755 = vmul.f32 %v754, %v739
    %v756 = vmul.f32 %v754, %v740
    %v757 = vadd.f32 %v731, %v755
    %v758 = vadd.f32 %v732, %v756
    %759 = vrot.lane.b32.xlu0 %v551, 111
    %v760 = vpop.permute.xlu0 %759
    %761 = vrot.lane.b32.xlu0 %v552, 111
    %v762 = vpop.permute.xlu0 %761
    %v763 = vsel %vm430, %v760, %v762
    %v764 = vsel %vm430, %v762, %v760
    %v765 = vsel %vm433, %v763, 0.0
    %v766 = vsel %vm434, %v764, 0.0
    %s767 = sld [smem:[#allocation10 + $0x8]]
    %v768 = vstv %s767
    %v769 = vmul.f32 %v768, %v765
    %v770 = vmul.f32 %v768, %v766
    %v771 = vadd.f32 %v745, %v769
    %v772 = vadd.f32 %v746, %v770
    %s773 = sld [smem:[#allocation10 + $0x11]]
    %v774 = vstv %s773
    %v775 = vmul.f32 %v774, %v765
    %v776 = vmul.f32 %v774, %v766
    %v777 = vadd.f32 %v751, %v775
    %v778 = vadd.f32 %v752, %v776
    %s779 = sld [smem:[#allocation10 + $0x1a]]
    %v780 = vstv %s779
    %v781 = vmul.f32 %v780, %v765
    %v782 = vmul.f32 %v780, %v766
    %v783 = vadd.f32 %v757, %v781
    %v784 = vadd.f32 %v758, %v782
    %s785 = sld [smem:[#allocation13]]
    %v786 = vstv %s785
    %v787 = vmul.f32 %v786, %v771
    %v788 = vmul.f32 %v786, %v772
    %s789 = sld [smem:[#allocation13 + $0x4]]
    %v790 = vstv %s789
    %v791 = vmul.f32 %v790, %v777
    %v792 = vmul.f32 %v790, %v778
    %v793 = vadd.f32 %v787, %v791
    %v794 = vadd.f32 %v788, %v792
    %s795 = sld [smem:[#allocation13 + $0x8]]
    %v796 = vstv %s795
    %v797 = vmul.f32 %v796, %v783
    %v798 = vmul.f32 %v796, %v784
    %v799 = vadd.f32 %v793, %v797
    %v800 = vadd.f32 %v794, %v798
    %s801 = sld [smem:[#allocation3]]
    %v802 = vstv %s801
    %v803 = vadd.f32 %v799, %v802
    %v804 = vadd.f32 %v800, %v802
    %s805 = sld [smem:[#allocation13 + $0x1]]
    %v806 = vstv %s805
    %v807 = vmul.f32 %v806, %v771
    %v808 = vmul.f32 %v806, %v772
    %s809 = sld [smem:[#allocation13 + $0x5]]
    %v810 = vstv %s809
    %v811 = vmul.f32 %v810, %v777
    %v812 = vmul.f32 %v810, %v778
    %v813 = vadd.f32 %v807, %v811
    %v814 = vadd.f32 %v808, %v812
    %s815 = sld [smem:[#allocation13 + $0x9]]
    %v816 = vstv %s815
    %v817 = vmul.f32 %v816, %v783
    %v818 = vmul.f32 %v816, %v784
    %v819 = vadd.f32 %v813, %v817
    %v820 = vadd.f32 %v814, %v818
    %821 = vrot.lane.b32.xlu0 %v819, 127
    %v822 = vpop.permute.xlu0 %821
    %823 = vrot.lane.b32.xlu0 %v820, 127
    %v824 = vpop.permute.xlu0 %823
    %v825 = vsel %vm347, %v822, %v824
    %v826 = vsel %vm347, %v824, %v822
    %v827 = vsel %vm163, %v825, 0.0
    %v828 = vsel %vm164, %v826, 0.0
    %v829 = vadd.f32 %v803, %v827
    %v830 = vadd.f32 %v804, %v828
    %s831 = sld [smem:[#allocation13 + $0x2]]
    %v832 = vstv %s831
    %v833 = vmul.f32 %v832, %v771
    %v834 = vmul.f32 %v832, %v772
    %s835 = sld [smem:[#allocation13 + $0x6]]
    %v836 = vstv %s835
    %v837 = vmul.f32 %v836, %v777
    %v838 = vmul.f32 %v836, %v778
    %v839 = vadd.f32 %v833, %v837
    %v840 = vadd.f32 %v834, %v838
    %s841 = sld [smem:[#allocation13 + $0xa]]
    %v842 = vstv %s841
    %v843 = vmul.f32 %v842, %v783
    %v844 = vmul.f32 %v842, %v784
    %v845 = vadd.f32 %v839, %v843
    %v846 = vadd.f32 %v840, %v844
    %847 = vrot.lane.b32.xlu0 %v845, 112
    %v848 = vpop.permute.xlu0 %847
    %849 = vrot.lane.b32.xlu0 %v846, 112
    %v850 = vpop.permute.xlu0 %849
    %v851 = vsel %vm403, %v848, %v850
    %v852 = vsel %vm403, %v850, %v848
    %v853 = vsel %vm159, %v851, 0.0
    %v854 = vsel %vm160, %v852, 0.0
    %v855 = vadd.f32 %v829, %v853
    %v856 = vadd.f32 %v830, %v854
    %s857 = sld [smem:[#allocation13 + $0x3]]
    %v858 = vstv %s857
    %v859 = vmul.f32 %v858, %v771
    %v860 = vmul.f32 %v858, %v772
    %s861 = sld [smem:[#allocation13 + $0x7]]
    %v862 = vstv %s861
    %v863 = vmul.f32 %v862, %v777
    %v864 = vmul.f32 %v862, %v778
    %v865 = vadd.f32 %v859, %v863
    %v866 = vadd.f32 %v860, %v864
    %s867 = sld [smem:[#allocation13 + $0xb]]
    %v868 = vstv %s867
    %v869 = vmul.f32 %v868, %v783
    %v870 = vmul.f32 %v868, %v784
    %v871 = vadd.f32 %v865, %v869
    %v872 = vadd.f32 %v866, %v870
    %873 = vrot.lane.b32.xlu0 %v871, 111
    %v874 = vpop.permute.xlu0 %873
    %875 = vrot.lane.b32.xlu0 %v872, 111
    %v876 = vpop.permute.xlu0 %875
    %v877 = vsel %vm430, %v874, %v876
    %v878 = vsel %vm430, %v876, %v874
    %v879 = vsel %vm433, %v877, 0.0
    %v880 = vsel %vm434, %v878, 0.0
    %v881 = vadd.f32 %v855, %v879
    %v882 = vadd.f32 %v856, %v880
    %883 = vrot.lane.b32.xlu0 %v881, 17
    %v884 = vpop.permute.xlu0 %883
    %885 = vrot.lane.b32.xlu0 %v882, 17
    %v886 = vpop.permute.xlu0 %885
    %v887 = vsel %vm181, %v884, %v886
    %v888 = vsel %vm181, %v886, %v884
    %v889 = vsel %vm184, %v888, 0.0
    %v890 = vsel %vm185, %v887, 0.0
    %s891 = sld [smem:[#allocation15]]
    %v892 = vstv %s891
    %v893 = vmul.f32 %v892, %v889
    %v894 = vmul.f32 %v892, %v890
    %s895 = sld [smem:[#allocation16]]
    %v896 = vstv %s895
    %v897 = vadd.f32 %v893, %v896
    %v898 = vadd.f32 %v894, %v896
    %s899 = sld [smem:[#allocation15 + $0x9]]
    %v900 = vstv %s899
    %v901 = vmul.f32 %v900, %v889
    %v902 = vmul.f32 %v900, %v890
    %s903 = sld [smem:[#allocation16 + $0x1]]
    %v904 = vstv %s903
    %v905 = vadd.f32 %v901, %v904
    %v906 = vadd.f32 %v902, %v904
    %s907 = sld [smem:[#allocation15 + $0x12]]
    %v908 = vstv %s907
    %v909 = vmul.f32 %v908, %v889
    %v910 = vmul.f32 %v908, %v890
    %s911 = sld [smem:[#allocation16 + $0x2]]
    %v912 = vstv %s911
    %v913 = vadd.f32 %v909, %v912
    %v914 = vadd.f32 %v910, %v912
    %915 = vrot.lane.b32.xlu0 %v881, 16
    %v916 = vpop.permute.xlu0 %915
    %917 = vrot.lane.b32.xlu0 %v882, 16
    %v918 = vpop.permute.xlu0 %917
    %v919 = vsel %vm216, %v916, %v918
    %v920 = vsel %vm216, %v918, %v916
    %v921 = vsel %vm157, %v920, 0.0
    %v922 = vsel %vm158, %v919, 0.0
    %s923 = sld [smem:[#allocation15 + $0x1]]
    %v924 = vstv %s923
    %v925 = vmul.f32 %v924, %v921
    %v926 = vmul.f32 %v924, %v922
    %v927 = vadd.f32 %v897, %v925
    %v928 = vadd.f32 %v898, %v926
    %s929 = sld [smem:[#allocation15 + $0xa]]
    %v930 = vstv %s929
    %v931 = vmul.f32 %v930, %v921
    %v932 = vmul.f32 %v930, %v922
    %v933 = vadd.f32 %v905, %v931
    %v934 = vadd.f32 %v906, %v932
    %s935 = sld [smem:[#allocation15 + $0x13]]
    %v936 = vstv %s935
    %v937 = vmul.f32 %v936, %v921
    %v938 = vmul.f32 %v936, %v922
    %v939 = vadd.f32 %v913, %v937
    %v940 = vadd.f32 %v914, %v938
    %941 = vrot.lane.b32.xlu0 %v881, 15
    %v942 = vpop.permute.xlu0 %941
    %943 = vrot.lane.b32.xlu0 %v882, 15
    %v944 = vpop.permute.xlu0 %943
    %v945 = vsel %vm243, %v942, %v944
    %v946 = vsel %vm243, %v944, %v942
    %v947 = vsel %vm246, %v946, 0.0
    %v948 = vsel %vm247, %v945, 0.0
    %s949 = sld [smem:[#allocation15 + $0x2]]
    %v950 = vstv %s949
    %v951 = vmul.f32 %v950, %v947
    %v952 = vmul.f32 %v950, %v948
    %v953 = vadd.f32 %v927, %v951
    %v954 = vadd.f32 %v928, %v952
    %s955 = sld [smem:[#allocation15 + $0xb]]
    %v956 = vstv %s955
    %v957 = vmul.f32 %v956, %v947
    %v958 = vmul.f32 %v956, %v948
    %v959 = vadd.f32 %v933, %v957
    %v960 = vadd.f32 %v934, %v958
    %s961 = sld [smem:[#allocation15 + $0x14]]
    %v962 = vstv %s961
    %v963 = vmul.f32 %v962, %v947
    %v964 = vmul.f32 %v962, %v948
    %v965 = vadd.f32 %v939, %v963
    %v966 = vadd.f32 %v940, %v964
    %967 = vrot.lane.b32.xlu0 %v881, 1
    %v968 = vpop.permute.xlu0 %967
    %969 = vrot.lane.b32.xlu0 %v882, 1
    %v970 = vpop.permute.xlu0 %969
    %v971 = vsel %vm272, %v968, %v970
    %v972 = vsel %vm272, %v970, %v968
    %v973 = vsel %vm161, %v972, 0.0
    %v974 = vsel %vm162, %v971, 0.0
    %s975 = sld [smem:[#allocation15 + $0x3]]
    %v976 = vstv %s975
    %v977 = vmul.f32 %v976, %v973
    %v978 = vmul.f32 %v976, %v974
    %v979 = vadd.f32 %v953, %v977
    %v980 = vadd.f32 %v954, %v978
    %s981 = sld [smem:[#allocation15 + $0xc]]
    %v982 = vstv %s981
    %v983 = vmul.f32 %v982, %v973
    %v984 = vmul.f32 %v982, %v974
    %v985 = vadd.f32 %v959, %v983
    %v986 = vadd.f32 %v960, %v984
    %s987 = sld [smem:[#allocation15 + $0x15]]
    %v988 = vstv %s987
    %v989 = vmul.f32 %v988, %v973
    %v990 = vmul.f32 %v988, %v974
    %v991 = vadd.f32 %v965, %v989
    %v992 = vadd.f32 %v966, %v990
    %s993 = sld [smem:[#allocation15 + $0x4]]
    %v994 = vstv %s993
    %v995 = vmul.f32 %v994, %v881
    %v996 = vmul.f32 %v994, %v882
    %v997 = vadd.f32 %v979, %v995
    %v998 = vadd.f32 %v980, %v996
    %s999 = sld [smem:[#allocation15 + $0xd]]
    %v1000 = vstv %s999
    %v1001 = vmul.f32 %v1000, %v881
    %v1002 = vmul.f32 %v1000, %v882
    %v1003 = vadd.f32 %v985, %v1001
    %v1004 = vadd.f32 %v986, %v1002
    %s1005 = sld [smem:[#allocation15 + $0x16]]
    %v1006 = vstv %s1005
    %v1007 = vmul.f32 %v1006, %v881
    %v1008 = vmul.f32 %v1006, %v882
    %v1009 = vadd.f32 %v991, %v1007
    %v1010 = vadd.f32 %v992, %v1008
    %1011 = vrot.lane.b32.xlu0 %v881, 127
    %v1012 = vpop.permute.xlu0 %1011
    %1013 = vrot.lane.b32.xlu0 %v882, 127
    %v1014 = vpop.permute.xlu0 %1013
    %v1015 = vsel %vm347, %v1012, %v1014
    %v1016 = vsel %vm347, %v1014, %v1012
    %v1017 = vsel %vm163, %v1015, 0.0
    %v1018 = vsel %vm164, %v1016, 0.0
    %s1019 = sld [smem:[#allocation15 + $0x5]]
    %v1020 = vstv %s1019
    %v1021 = vmul.f32 %v1020, %v1017
    %v1022 = vmul.f32 %v1020, %v1018
    %v1023 = vadd.f32 %v997, %v1021
    %v1024 = vadd.f32 %v998, %v1022
    %s1025 = sld [smem:[#allocation15 + $0xe]]
    %v1026 = vstv %s1025
    %v1027 = vmul.f32 %v1026, %v1017
    %v1028 = vmul.f32 %v1026, %v1018
    %v1029 = vadd.f32 %v1003, %v1027
    %v1030 = vadd.f32 %v1004, %v1028
    %s1031 = sld [smem:[#allocation15 + $0x17]]
    %v1032 = vstv %s1031
    %v1033 = vmul.f32 %v1032, %v1017
    %v1034 = vmul.f32 %v1032, %v1018
    %v1035 = vadd.f32 %v1009, %v1033
    %v1036 = vadd.f32 %v1010, %v1034
    %1037 = vrot.lane.b32.xlu0 %v881, 113
    %v1038 = vpop.permute.xlu0 %1037
    %1039 = vrot.lane.b32.xlu0 %v882, 113
    %v1040 = vpop.permute.xlu0 %1039
    %v1041 = vsel %vm374, %v1038, %v1040
    %v1042 = vsel %vm374, %v1040, %v1038
    %v1043 = vsel %vm377, %v1041, 0.0
    %v1044 = vsel %vm378, %v1042, 0.0
    %s1045 = sld [smem:[#allocation15 + $0x6]]
    %v1046 = vstv %s1045
    %v1047 = vmul.f32 %v1046, %v1043
    %v1048 = vmul.f32 %v1046, %v1044
    %v1049 = vadd.f32 %v1023, %v1047
    %v1050 = vadd.f32 %v1024, %v1048
    %s1051 = sld [smem:[#allocation15 + $0xf]]
    %v1052 = vstv %s1051
    %v1053 = vmul.f32 %v1052, %v1043
    %v1054 = vmul.f32 %v1052, %v1044
    %v1055 = vadd.f32 %v1029, %v1053
    %v1056 = vadd.f32 %v1030, %v1054
    %s1057 = sld [smem:[#allocation15 + $0x18]]
    %v1058 = vstv %s1057
    %v1059 = vmul.f32 %v1058, %v1043
    %v1060 = vmul.f32 %v1058, %v1044
    %v1061 = vadd.f32 %v1035, %v1059
    %v1062 = vadd.f32 %v1036, %v1060
    %1063 = vrot.lane.b32.xlu0 %v881, 112
    %v1064 = vpop.permute.xlu0 %1063
    %1065 = vrot.lane.b32.xlu0 %v882, 112
    %v1066 = vpop.permute.xlu0 %1065
    %v1067 = vsel %vm403, %v1064, %v1066
    %v1068 = vsel %vm403, %v1066, %v1064
    %v1069 = vsel %vm159, %v1067, 0.0
    %v1070 = vsel %vm160, %v1068, 0.0
    %s1071 = sld [smem:[#allocation15 + $0x7]]
    %v1072 = vstv %s1071
    %v1073 = vmul.f32 %v1072, %v1069
    %v1074 = vmul.f32 %v1072, %v1070
    %v1075 = vadd.f32 %v1049, %v1073
    %v1076 = vadd.f32 %v1050, %v1074
    %s1077 = sld [smem:[#allocation15 + $0x10]]
    %v1078 = vstv %s1077
    %v1079 = vmul.f32 %v1078, %v1069
    %v1080 = vmul.f32 %v1078, %v1070
    %v1081 = vadd.f32 %v1055, %v1079
    %v1082 = vadd.f32 %v1056, %v1080
    %s1083 = sld [smem:[#allocation15 + $0x19]]
    %v1084 = vstv %s1083
    %v1085 = vmul.f32 %v1084, %v1069
    %v1086 = vmul.f32 %v1084, %v1070
    %v1087 = vadd.f32 %v1061, %v1085
    %v1088 = vadd.f32 %v1062, %v1086
    %1089 = vrot.lane.b32.xlu0 %v881, 111
    %v1090 = vpop.permute.xlu0 %1089
    %1091 = vrot.lane.b32.xlu0 %v882, 111
    %v1092 = vpop.permute.xlu0 %1091
    %v1093 = vsel %vm430, %v1090, %v1092
    %v1094 = vsel %vm430, %v1092, %v1090
    %v1095 = vsel %vm433, %v1093, 0.0
    %v1096 = vsel %vm434, %v1094, 0.0
    %s1097 = sld [smem:[#allocation15 + $0x8]]
    %v1098 = vstv %s1097
    %v1099 = vmul.f32 %v1098, %v1095
    %v1100 = vmul.f32 %v1098, %v1096
    %v1101 = vadd.f32 %v1075, %v1099
    %v1102 = vadd.f32 %v1076, %v1100
    %s1103 = sld [smem:[#allocation15 + $0x11]]
    %v1104 = vstv %s1103
    %v1105 = vmul.f32 %v1104, %v1095
    %v1106 = vmul.f32 %v1104, %v1096
    %v1107 = vadd.f32 %v1081, %v1105
    %v1108 = vadd.f32 %v1082, %v1106
    %s1109 = sld [smem:[#allocation15 + $0x1a]]
    %v1110 = vstv %s1109
    %v1111 = vmul.f32 %v1110, %v1095
    %v1112 = vmul.f32 %v1110, %v1096
    %v1113 = vadd.f32 %v1087, %v1111
    %v1114 = vadd.f32 %v1088, %v1112
    %s1115 = sld [smem:[#allocation18]]
    %v1116 = vstv %s1115
    %v1117 = vmul.f32 %v1116, %v1101
    %v1118 = vmul.f32 %v1116, %v1102
    %s1119 = sld [smem:[#allocation18 + $0x4]]
    %v1120 = vstv %s1119
    %v1121 = vmul.f32 %v1120, %v1107
    %v1122 = vmul.f32 %v1120, %v1108
    %v1123 = vadd.f32 %v1117, %v1121
    %v1124 = vadd.f32 %v1118, %v1122
    %s1125 = sld [smem:[#allocation18 + $0x8]]
    %v1126 = vstv %s1125
    %v1127 = vmul.f32 %v1126, %v1113
    %v1128 = vmul.f32 %v1126, %v1114
    %v1129 = vadd.f32 %v1123, %v1127
    %v1130 = vadd.f32 %v1124, %v1128
    %s1131 = sld [smem:[#allocation4]]
    %v1132 = vstv %s1131
    %v1133 = vadd.f32 %v1129, %v1132
    %v1134 = vadd.f32 %v1130, %v1132
    %s1135 = sld [smem:[#allocation18 + $0x1]]
    %v1136 = vstv %s1135
    %v1137 = vmul.f32 %v1136, %v1101
    %v1138 = vmul.f32 %v1136, %v1102
    %s1139 = sld [smem:[#allocation18 + $0x5]]
    %v1140 = vstv %s1139
    %v1141 = vmul.f32 %v1140, %v1107
    %v1142 = vmul.f32 %v1140, %v1108
    %v1143 = vadd.f32 %v1137, %v1141
    %v1144 = vadd.f32 %v1138, %v1142
    %s1145 = sld [smem:[#allocation18 + $0x9]]
    %v1146 = vstv %s1145
    %v1147 = vmul.f32 %v1146, %v1113
    %v1148 = vmul.f32 %v1146, %v1114
    %v1149 = vadd.f32 %v1143, %v1147
    %v1150 = vadd.f32 %v1144, %v1148
    %1151 = vrot.lane.b32.xlu0 %v1149, 127
    %v1152 = vpop.permute.xlu0 %1151
    %1153 = vrot.lane.b32.xlu0 %v1150, 127
    %v1154 = vpop.permute.xlu0 %1153
    %v1155 = vsel %vm347, %v1152, %v1154
    %v1156 = vsel %vm347, %v1154, %v1152
    %v1157 = vsel %vm163, %v1155, 0.0
    %v1158 = vsel %vm164, %v1156, 0.0
    %v1159 = vadd.f32 %v1133, %v1157
    %v1160 = vadd.f32 %v1134, %v1158
    %s1161 = sld [smem:[#allocation18 + $0x2]]
    %v1162 = vstv %s1161
    %v1163 = vmul.f32 %v1162, %v1101
    %v1164 = vmul.f32 %v1162, %v1102
    %s1165 = sld [smem:[#allocation18 + $0x6]]
    %v1166 = vstv %s1165
    %v1167 = vmul.f32 %v1166, %v1107
    %v1168 = vmul.f32 %v1166, %v1108
    %v1169 = vadd.f32 %v1163, %v1167
    %v1170 = vadd.f32 %v1164, %v1168
    %s1171 = sld [smem:[#allocation18 + $0xa]]
    %v1172 = vstv %s1171
    %v1173 = vmul.f32 %v1172, %v1113
    %v1174 = vmul.f32 %v1172, %v1114
    %v1175 = vadd.f32 %v1169, %v1173
    %v1176 = vadd.f32 %v1170, %v1174
    %1177 = vrot.lane.b32.xlu0 %v1175, 112
    %v1178 = vpop.permute.xlu0 %1177
    %1179 = vrot.lane.b32.xlu0 %v1176, 112
    %v1180 = vpop.permute.xlu0 %1179
    %v1181 = vsel %vm403, %v1178, %v1180
    %v1182 = vsel %vm403, %v1180, %v1178
    %v1183 = vsel %vm159, %v1181, 0.0
    %v1184 = vsel %vm160, %v1182, 0.0
    %v1185 = vadd.f32 %v1159, %v1183
    %v1186 = vadd.f32 %v1160, %v1184
    %s1187 = sld [smem:[#allocation18 + $0x3]]
    %v1188 = vstv %s1187
    %v1189 = vmul.f32 %v1188, %v1101
    %v1190 = vmul.f32 %v1188, %v1102
    %s1191 = sld [smem:[#allocation18 + $0x7]]
    %v1192 = vstv %s1191
    %v1193 = vmul.f32 %v1192, %v1107
    %v1194 = vmul.f32 %v1192, %v1108
    %v1195 = vadd.f32 %v1189, %v1193
    %v1196 = vadd.f32 %v1190, %v1194
    %s1197 = sld [smem:[#allocation18 + $0xb]]
    %v1198 = vstv %s1197
    %v1199 = vmul.f32 %v1198, %v1113
    %v1200 = vmul.f32 %v1198, %v1114
    %v1201 = vadd.f32 %v1195, %v1199
    %v1202 = vadd.f32 %v1196, %v1200
    %1203 = vrot.lane.b32.xlu0 %v1201, 111
    %v1204 = vpop.permute.xlu0 %1203
    %1205 = vrot.lane.b32.xlu0 %v1202, 111
    %v1206 = vpop.permute.xlu0 %1205
    %v1207 = vsel %vm430, %v1204, %v1206
    %v1208 = vsel %vm430, %v1206, %v1204
    %v1209 = vsel %vm433, %v1207, 0.0
    %v1210 = vsel %vm434, %v1208, 0.0
    %v1211 = vadd.f32 %v1185, %v1209
    %v1212 = vadd.f32 %v1186, %v1210
    %v1215 = vcombine.low %v1211, %v1212
    %v1217 = vunpack.c.l.s4 1983009808
    %v1218 = vunpack.c.0.s8 %v1217
    %v1219 = vlaneseq
    %v1220 = vshrl.u32 %v1219, 7
    %v1221 = vsub.s32 %v1218, %v1220
    %v1222 = vrot.slane %v1215, %v1221
    %1224 = vst [vmem:[%s13] sm:$0xf] %v1222
    // Predicated region
    $region90: #{custom_model_fused.1} parent=1 // pred_check
      _
    $region91: #{custom_model_fused.1} parent=1 // pred_check_branch
      %1226 = sbr.rel (0) target = $region93
    $region92: #{custom_model_fused.1} parent=1 // pred_region
      _
    $region93: #{custom_model_fused.1} parent=1 // pred_fallthru
      _
    // Predicated region
    $region94: #{custom_model_fused.1} parent=1 // pred_check
      _
    $region95: #{custom_model_fused.1} parent=1 // pred_check_branch
      %1228 = sbr.rel (0) target = $region97
    $region96: #{custom_model_fused.1} parent=1 // pred_region
      _
    $region97: #{custom_model_fused.1} parent=1 // pred_fallthru
      _
    %1229 = vsyncpa [#allocation6], 1
    %1230 = vsyncpa [#allocation8], 1
    %1231 = vsyncpa [#allocation11], 1
    %1232 = vsyncpa [#allocation14], 1
    %1233 = vsyncpa [#allocation17], 1

</llo_original>
